<compile_context>
chip_gen: v5e
topology: v5e:2x2
jax: 0.10.0
libtpu: 0.0.40
codegen_flags: <defaults>
</compile_context>

<pallas_src>
import functools
import math

import jax
import jax.numpy as jnp
from jax.experimental import pallas as pl
from jax.experimental.pallas import tpu as pltpu


LN_EPS = 1e-5
_GELU_C = math.sqrt(2.0 / math.pi)


def _gelu(x):
    # tanh-approx gelu; x*x*x keeps this on 2 VALU muls + one EUP tanh.
    return 0.5 * x * (1.0 + jnp.tanh(_GELU_C * (x + 0.044715 * (x * x * x))))


def _layernorm(x, g, b):
    # TF-style layernorm (eps inside the sqrt), matching the reference module.
    u = jnp.mean(x, axis=-1, keepdims=True)
    xc = x - u
    s = jnp.mean(xc * xc, axis=-1, keepdims=True)
    return xc * jax.lax.rsqrt(s + LN_EPS) * g + b


# ----------------------------------------------------------------------------------
# Kernel 1: LN1 + causal multi-head self-attention + output projection + residual
# ----------------------------------------------------------------------------------
def _ln_attn_kernel(x_ref, g1_ref, b1_ref, wqkv_ref, bqkv_ref, wo_ref, bo_ref,
                    y_ref, k_ref, v_ref, *, n_head):
    x = x_ref[0]                                   # (S, nx) f32
    S, nx = x.shape
    hd = nx // n_head

    ln = _layernorm(x, g1_ref[...], b1_ref[...])
    qkv = jnp.dot(ln, wqkv_ref[...], preferred_element_type=jnp.float32) + bqkv_ref[...]
    q = qkv[:, 0 * nx:1 * nx]
    k = qkv[:, 1 * nx:2 * nx]
    v = qkv[:, 2 * nx:3 * nx]

    # Causal mask exactly as in the reference: w*b - 1e10*(1-b), then softmax.
    row = jax.lax.broadcasted_iota(jnp.int32, (S, S), 0)
    col = jax.lax.broadcasted_iota(jnp.int32, (S, S), 1)
    causal = (row >= col).astype(jnp.float32)

    wo = wo_ref[...]                               # (nx, nx) resident
    a = jnp.zeros((S, nx), jnp.float32)
    for h in range(n_head):                        # static unroll over heads (2D ops only)
        sl = slice(h * hd, (h + 1) * hd)
        qh, kh, vh = q[:, sl], k[:, sl], v[:, sl]
        # scores = qh @ kh.T   (scale=False, matching Block's default)
        w = jax.lax.dot_general(qh, kh, (((1,), (1,)), ((), ())),
                                preferred_element_type=jnp.float32)
        w = w * causal - 1e10 * (1.0 - causal)
        w = w - jnp.max(w, axis=-1, keepdims=True)
        e = jnp.exp(w)
        p = e / jnp.sum(e, axis=-1, keepdims=True)
        oh = jnp.dot(p, vh, preferred_element_type=jnp.float32)          # (S, hd)
        # merge_heads(o) @ W_proj == sum_h oh @ W_proj[h*hd:(h+1)*hd, :]
        a = a + jnp.dot(oh, wo[sl, :], preferred_element_type=jnp.float32)
    a = a + bo_ref[...]

    y_ref[0] = (x + a).astype(y_ref.dtype)          # fused residual: x + attn(ln1(x))
    k_ref[0] = k.astype(k_ref.dtype)                # raw k/v rows for `present`
    v_ref[0] = v.astype(v_ref.dtype)


# ----------------------------------------------------------------------------------
# Kernel 2: LN2 + MLP (c_fc -> gelu -> c_proj) + residual, tiled over flattened rows
# ----------------------------------------------------------------------------------
def _ln_mlp_kernel(x_ref, g2_ref, b2_ref, wfc_ref, bfc_ref, wpr_ref, bpr_ref, o_ref):
    x = x_ref[...]                                  # (tm, nx) f32
    ln = _layernorm(x, g2_ref[...], b2_ref[...])    # LN stays f32 (VPU/EUP, v5e-safe)
    # bf16 MXU operands, f32 accumulation (v6e/v7x MXU rate; halves weight VMEM/HBM).
    h = jnp.dot(ln.astype(jnp.bfloat16), wfc_ref[...],
                preferred_element_type=jnp.float32) + bfc_ref[...]
    h = _gelu(h)                                    # bias add + gelu in f32
    h2 = jnp.dot(h.astype(jnp.bfloat16), wpr_ref[...],
                 preferred_element_type=jnp.float32) + bpr_ref[...]
    o_ref[...] = (x + h2).astype(o_ref.dtype)       # fused residual: x1 + mlp(ln2(x1))


def _pick_tm(M, nx, n_state, vmem_budget_bytes=24 * 1024 * 1024):
    """Row-tile size: large enough to amortize the ~0.35us per-step overhead, small
    enough for a conservative scoped-VMEM budget (sized for v7x's 64 MiB VMEM), and
    giving >=2 grid steps where possible (pipelining + v7x dual TensorCores)."""
    def est_bytes(tm):
        io = 2 * 2 * tm * nx * 4            # double-buffered f32 in/out row tiles
        wgt = 2 * 2 * nx * n_state * 2      # double-buffered bf16 W_fc + W_proj
        mid = tm * n_state * 4              # live f32 hidden intermediate
        return io + wgt + mid

    tm = 512
    while tm > 8 and est_bytes(tm) > vmem_budget_bytes:
        tm //= 2
    half = max(8, (M // 2) // 8 * 8)        # keep at least 2 grid steps if M allows
    return max(8, min(tm, half))


def block_forward(x, params, *, n_head, tm=None):
    """x: [batch, seq, n_embd] f32.  Returns (out, present) like Block.forward."""
    B, S, nx = x.shape
    n_state = params["w_fc"].shape[1]
    hd = nx // n_head

    # ---------------- LN1 + attention + residual (grid over batch) ----------------
    y, k_raw, v_raw = pl.pallas_call(
        functools.partial(_ln_attn_kernel, n_head=n_head),
        out_shape=(
            jax.ShapeDtypeStruct((B, S, nx), x.dtype),
            jax.ShapeDtypeStruct((B, S, nx), jnp.float32),
            jax.ShapeDtypeStruct((B, S, nx), jnp.float32),
        ),
        grid_spec=pltpu.PrefetchScalarGridSpec(
            num_scalar_prefetch=0,
            grid=(B,),
            in_specs=[
                pl.BlockSpec((1, S, nx), lambda b: (b, 0, 0)),      # x rows
                pl.BlockSpec((1, nx), lambda b: (0, 0)),            # ln1 gamma
                pl.BlockSpec((1, nx), lambda b: (0, 0)),            # ln1 beta
                pl.BlockSpec((nx, 3 * nx), lambda b: (0, 0)),       # W_attn (resident)
                pl.BlockSpec((1, 3 * nx), lambda b: (0, 0)),        # b_attn
                pl.BlockSpec((nx, nx), lambda b: (0, 0)),           # W_aproj (resident)
                pl.BlockSpec((1, nx), lambda b: (0, 0)),            # b_aproj
            ],
            out_specs=(
                pl.BlockSpec((1, S, nx), lambda b: (b, 0, 0)),
                pl.BlockSpec((1, S, nx), lambda b: (b, 0, 0)),
                pl.BlockSpec((1, S, nx), lambda b: (b, 0, 0)),
            ),
        ),
        compiler_params=pltpu.CompilerParams(dimension_semantics=("parallel",)),
    )(x, params["ln1_g"].reshape(1, nx), params["ln1_b"].reshape(1, nx),
      params["w_attn"], params["b_attn"].reshape(1, 3 * nx),
      params["w_aproj"], params["b_aproj"].reshape(1, nx))

    def _to_heads(t):   # (B, S, nx) -> (B, n_head, S, hd)
        return t.reshape(B, S, n_head, hd).transpose(0, 2, 1, 3)

    present = jnp.stack([_to_heads(k_raw), _to_heads(v_raw)], axis=0)

    # ---------------- LN2 + MLP + residual (row-tiled, pipelined) ------------------
    M = B * S
    x1 = y.reshape(M, nx)
    if tm is None:
        tm = _pick_tm(M, nx, n_state)
    M_pad = pl.cdiv(M, tm) * tm
    x1p = x1 if M_pad == M else jnp.pad(x1, ((0, M_pad - M), (0, 0)))

    # Cast weights once in the wrapper: bf16 MXU operands, halves resident VMEM/HBM.
    w_fc_bf16 = params["w_fc"].astype(jnp.bfloat16)
    w_mproj_bf16 = params["w_mproj"].astype(jnp.bfloat16)

    cost = pl.CostEstimate(
        flops=4 * M_pad * nx * n_state,                       # two matmuls
        transcendentals=M_pad * n_state,                      # tanh in gelu
        bytes_accessed=2 * M_pad * nx * 4                     # x in + out (f32)
                       + 2 * nx * n_state * 2                 # bf16 weights
                       + (n_state + 3 * nx) * 4,              # biases + ln params
    )

    out2d = pl.pallas_call(
        _ln_mlp_kernel,
        out_shape=jax.ShapeDtypeStruct((M_pad, nx), x.dtype),
        grid_spec=pltpu.PrefetchScalarGridSpec(
            num_scalar_prefetch=0,
            grid=(M_pad // tm,),
            in_specs=[
                pl.BlockSpec((tm, nx), lambda i: (i, 0)),           # x1 row tile
                pl.BlockSpec((1, nx), lambda i: (0, 0)),            # ln2 gamma
                pl.BlockSpec((1, nx), lambda i: (0, 0)),            # ln2 beta
                pl.BlockSpec((nx, n_state), lambda i: (0, 0)),      # W_fc (bf16, resident)
                pl.BlockSpec((1, n_state), lambda i: (0, 0)),       # b_fc
                pl.BlockSpec((n_state, nx), lambda i: (0, 0)),      # W_proj (bf16, resident)
                pl.BlockSpec((1, nx), lambda i: (0, 0)),            # b_proj
            ],
            out_specs=pl.BlockSpec((tm, nx), lambda i: (i, 0)),
        ),
        compiler_params=pltpu.CompilerParams(dimension_semantics=("parallel",)),
        cost_estimate=cost,
    )(x1p, params["ln2_g"].reshape(1, nx), params["ln2_b"].reshape(1, nx),
      w_fc_bf16, params["b_fc"].reshape(1, n_state),
      w_mproj_bf16, params["b_mproj"].reshape(1, nx))

    out = out2d[:M].reshape(B, S, nx)
    return out, present


# ----------------------------------------------------------------------------------
# Pure-JAX reference mirroring the PyTorch Block.forward (layer_past=None, scale=False)
# ----------------------------------------------------------------------------------
def block_reference(x, params, *, n_head):
    HI = jax.lax.Precision.HIGHEST
    B, S, nx = x.shape
    hd = nx // n_head

    ln1 = _layernorm(x, params["ln1_g"], params["ln1_b"])
    qkv = jnp.einsum("bsd,df->bsf", ln1, params["w_attn"], precision=HI) + params["b_attn"]
    q, k, v = jnp.split(qkv, 3, axis=-1)

    def heads(t):
        return t.reshape(B, S, n_head, hd).transpose(0, 2, 1, 3)

    qh, kh, vh = heads(q), heads(k), heads(v)
    w = jnp.einsum("bhqd,bhkd->bhqk", qh, kh, precision=HI)
    causal = jnp.tril(jnp.ones((S, S), jnp.float32))
    w = w * causal - 1e10 * (1.0 - causal)
    p = jax.nn.softmax(w, axis=-1)
    a = jnp.einsum("bhqk,bhkd->bhqd", p, vh, precision=HI)
    a = a.transpose(0, 2, 1, 3).reshape(B, S, nx)
    a = jnp.einsum("bsd,de->bse", a, params["w_aproj"], precision=HI) + params["b_aproj"]

    x1 = x + a
    ln2 = _layernorm(x1, params["ln2_g"], params["ln2_b"])
    h = _gelu(jnp.einsum("bsd,df->bsf", ln2, params["w_fc"], precision=HI) + params["b_fc"])
    m = jnp.einsum("bsf,fd->bsd", h, params["w_mproj"], precision=HI) + params["b_mproj"]
    out = x1 + m

    present = jnp.stack([kh, vh], axis=0)
    return out, present


if __name__ == "__main__":
    # Small shapes consistent with the module: n_embd=32, n_head=4, n_state=4*n_embd.
    batch, seq, n_embd, n_head = 2, 8, 32, 4
    n_state = 4 * n_embd

    key = jax.random.PRNGKey(0)
    ks = jax.random.split(key, 12)

    x = jax.random.normal(ks[0], (batch, seq, n_embd), dtype=jnp.float32)
    params = dict(
        ln1_g=1.0 + 0.1 * jax.random.normal(ks[1], (n_embd,), jnp.float32),
        ln1_b=0.1 * jax.random.normal(ks[2], (n_embd,), jnp.float32),
        w_attn=0.02 * jax.random.normal(ks[3], (n_embd, 3 * n_embd), jnp.float32),
        b_attn=0.02 * jax.random.normal(ks[4], (3 * n_embd,), jnp.float32),
        w_aproj=0.02 * jax.random.normal(ks[5], (n_embd, n_embd), jnp.float32),
        b_aproj=0.02 * jax.random.normal(ks[6], (n_embd,), jnp.float32),
        ln2_g=1.0 + 0.1 * jax.random.normal(ks[7], (n_embd,), jnp.float32),
        ln2_b=0.1 * jax.random.normal(ks[8], (n_embd,), jnp.float32),
        w_fc=0.02 * jax.random.normal(ks[9], (n_embd, n_state), jnp.float32),
        b_fc=0.02 * jax.random.normal(ks[10], (n_state,), jnp.float32),
        w_mproj=0.02 * jax.random.normal(ks[11], (n_state, n_embd), jnp.float32),
        b_mproj=jnp.zeros((n_embd,), jnp.float32),
    )

    out, present = block_forward(x, params, n_head=n_head)
    out = jax.block_until_ready(out)
    present = jax.block_until_ready(present)

    ref_out, ref_present = block_reference(x, params, n_head=n_head)

    assert out.shape == (batch, seq, n_embd)
    assert present.shape == (2, batch, n_head, seq, n_embd // n_head)
    assert jnp.allclose(present, ref_present, atol=5e-3, rtol=5e-3), "present mismatch"
    max_err = float(jnp.max(jnp.abs(out - ref_out)))
    assert jnp.allclose(out, ref_out, atol=2e-2, rtol=2e-2), f"out mismatch (max {max_err})"

    print("KERNEL_OK")
</pallas_src>

<mosaic_0001>
module attributes {stable_mosaic.version = 11 : i64} {
  func.func @_ln_attn_kernel(%arg0: i32, %arg1: memref<1x8x32xf32, #tpu.memory_space<vmem>>, %arg2: memref<1x32xf32, #tpu.memory_space<vmem>>, %arg3: memref<1x32xf32, #tpu.memory_space<vmem>>, %arg4: memref<32x96xf32, #tpu.memory_space<vmem>>, %arg5: memref<1x96xf32, #tpu.memory_space<vmem>>, %arg6: memref<32x32xf32, #tpu.memory_space<vmem>>, %arg7: memref<1x32xf32, #tpu.memory_space<vmem>>, %arg8: memref<1x8x32xf32, #tpu.memory_space<vmem>>, %arg9: memref<1x8x32xf32, #tpu.memory_space<vmem>>, %arg10: memref<1x8x32xf32, #tpu.memory_space<vmem>>) attributes {dimension_semantics = [#tpu.dimension_semantics<parallel>], iteration_bounds = array<i64: 2>, scalar_prefetch = 0 : i64, scratch_operands = 0 : i64, tpu.core_type = #tpu.core_type<tc>, window_params = [{transform_indices = @transform_0, window_bounds = array<i64: 1, 8, 32>}, {pipeline_mode = #tpu.pipeline_mode<synchronous>, transform_indices = @transform_1, window_bounds = array<i64: 1, 32>}, {pipeline_mode = #tpu.pipeline_mode<synchronous>, transform_indices = @transform_2, window_bounds = array<i64: 1, 32>}, {pipeline_mode = #tpu.pipeline_mode<synchronous>, transform_indices = @transform_3, window_bounds = array<i64: 32, 96>}, {pipeline_mode = #tpu.pipeline_mode<synchronous>, transform_indices = @transform_4, window_bounds = array<i64: 1, 96>}, {pipeline_mode = #tpu.pipeline_mode<synchronous>, transform_indices = @transform_5, window_bounds = array<i64: 32, 32>}, {pipeline_mode = #tpu.pipeline_mode<synchronous>, transform_indices = @transform_6, window_bounds = array<i64: 1, 32>}, {transform_indices = @transform_7, window_bounds = array<i64: 1, 8, 32>}, {transform_indices = @transform_8, window_bounds = array<i64: 1, 8, 32>}, {transform_indices = @transform_9, window_bounds = array<i64: 1, 8, 32>}]} {
    %c0 = arith.constant 0 : index
    %c0_0 = arith.constant 0 : index
    %c0_1 = arith.constant 0 : index
    %0 = vector.load %arg1[%c0, %c0_0, %c0_1] : memref<1x8x32xf32, #tpu.memory_space<vmem>>, vector<1x8x32xf32>
    %1 = vector.shape_cast %0 : vector<1x8x32xf32> to vector<8x32xf32>
    %c0_2 = arith.constant 0 : index
    %c0_3 = arith.constant 0 : index
    %2 = vector.load %arg2[%c0_2, %c0_3] : memref<1x32xf32, #tpu.memory_space<vmem>>, vector<1x32xf32>
    %c0_4 = arith.constant 0 : index
    %c0_5 = arith.constant 0 : index
    %3 = vector.load %arg3[%c0_4, %c0_5] : memref<1x32xf32, #tpu.memory_space<vmem>>, vector<1x32xf32>
    %cst = arith.constant dense<0.000000e+00> : vector<8xf32>
    %4 = vector.multi_reduction <add>, %1, %cst [1] : vector<8x32xf32> to vector<8xf32>
    %5 = vector.shape_cast %4 : vector<8xf32> to vector<8x1xf32>
    %cst_6 = arith.constant 3.200000e+01 : f32
    %6 = vector.broadcast %cst_6 : f32 to vector<8x1xf32>
    %7 = arith.divf %5, %6 : vector<8x1xf32>
    %8 = vector.broadcast %7 : vector<8x1xf32> to vector<8x32xf32>
    %9 = arith.subf %1, %8 : vector<8x32xf32>
    %10 = arith.mulf %9, %9 : vector<8x32xf32>
    %cst_7 = arith.constant dense<0.000000e+00> : vector<8xf32>
    %11 = vector.multi_reduction <add>, %10, %cst_7 [1] : vector<8x32xf32> to vector<8xf32>
    %12 = vector.shape_cast %11 : vector<8xf32> to vector<8x1xf32>
    %cst_8 = arith.constant 3.200000e+01 : f32
    %13 = vector.broadcast %cst_8 : f32 to vector<8x1xf32>
    %14 = arith.divf %12, %13 : vector<8x1xf32>
    %cst_9 = arith.constant 9.99999974E-6 : f32
    %15 = vector.broadcast %cst_9 : f32 to vector<8x1xf32>
    %16 = arith.addf %14, %15 : vector<8x1xf32>
    %17 = math.rsqrt %16 : vector<8x1xf32>
    %18 = vector.broadcast %17 : vector<8x1xf32> to vector<8x32xf32>
    %19 = arith.mulf %9, %18 : vector<8x32xf32>
    %20 = vector.broadcast %2 : vector<1x32xf32> to vector<8x32xf32>
    %21 = arith.mulf %19, %20 : vector<8x32xf32>
    %22 = vector.broadcast %3 : vector<1x32xf32> to vector<8x32xf32>
    %23 = arith.addf %21, %22 : vector<8x32xf32>
    %c0_10 = arith.constant 0 : index
    %c0_11 = arith.constant 0 : index
    %24 = vector.load %arg4[%c0_10, %c0_11] : memref<32x96xf32, #tpu.memory_space<vmem>>, vector<32x96xf32>
    %cst_12 = arith.constant dense<0.000000e+00> : vector<8x96xf32>
    %25 = tpu.matmul %23, %24, %cst_12 {dimension_numbers = #tpu.dot_dimension_numbers<[1], [0], [0], [1], [0, 0, 1, 1], [], []>} : vector<8x32xf32>, vector<32x96xf32>, vector<8x96xf32> -> vector<8x96xf32>
    %c0_13 = arith.constant 0 : index
    %c0_14 = arith.constant 0 : index
    %26 = vector.load %arg5[%c0_13, %c0_14] : memref<1x96xf32, #tpu.memory_space<vmem>>, vector<1x96xf32>
    %27 = vector.broadcast %26 : vector<1x96xf32> to vector<8x96xf32>
    %28 = arith.addf %25, %27 : vector<8x96xf32>
    %29 = vector.extract_strided_slice %28 {offsets = [0, 0], sizes = [8, 32], strides = [1, 1]} : vector<8x96xf32> to vector<8x32xf32>
    %30 = vector.extract_strided_slice %28 {offsets = [0, 32], sizes = [8, 32], strides = [1, 1]} : vector<8x96xf32> to vector<8x32xf32>
    %31 = vector.extract_strided_slice %28 {offsets = [0, 64], sizes = [8, 32], strides = [1, 1]} : vector<8x96xf32> to vector<8x32xf32>
    %32 = tpu.iota {dimensions = array<i32: 0>} : vector<8x8xi32>
    %33 = tpu.iota {dimensions = array<i32: 1>} : vector<8x8xi32>
    %34 = arith.cmpi sge, %32, %33 : vector<8x8xi32>
    %35 = arith.extui %34 : vector<8x8xi1> to vector<8x8xi32>
    %36 = arith.sitofp %35 : vector<8x8xi32> to vector<8x8xf32>
    %c0_15 = arith.constant 0 : index
    %c0_16 = arith.constant 0 : index
    %37 = vector.load %arg6[%c0_15, %c0_16] : memref<32x32xf32, #tpu.memory_space<vmem>>, vector<32x32xf32>
    %cst_17 = arith.constant 0.000000e+00 : f32
    %38 = vector.broadcast %cst_17 : f32 to vector<8x32xf32>
    %39 = vector.extract_strided_slice %29 {offsets = [0, 0], sizes = [8, 8], strides = [1, 1]} : vector<8x32xf32> to vector<8x8xf32>
    %40 = vector.extract_strided_slice %30 {offsets = [0, 0], sizes = [8, 8], strides = [1, 1]} : vector<8x32xf32> to vector<8x8xf32>
    %41 = vector.extract_strided_slice %31 {offsets = [0, 0], sizes = [8, 8], strides = [1, 1]} : vector<8x32xf32> to vector<8x8xf32>
    %cst_18 = arith.constant dense<0.000000e+00> : vector<8x8xf32>
    %42 = tpu.matmul %39, %40, %cst_18 {dimension_numbers = #tpu.dot_dimension_numbers<[1], [1], [0], [0], [0, 0, 1, 0], [], []>} : vector<8x8xf32>, vector<8x8xf32>, vector<8x8xf32> -> vector<8x8xf32>
    %43 = arith.mulf %42, %36 : vector<8x8xf32>
    %cst_19 = arith.constant 1.000000e+00 : f32
    %44 = vector.broadcast %cst_19 : f32 to vector<8x8xf32>
    %45 = arith.subf %44, %36 : vector<8x8xf32>
    %cst_20 = arith.constant 1.000000e+10 : f32
    %46 = vector.broadcast %cst_20 : f32 to vector<8x8xf32>
    %47 = arith.mulf %46, %45 : vector<8x8xf32>
    %48 = arith.subf %43, %47 : vector<8x8xf32>
    %cst_21 = arith.constant dense<0xFF800000> : vector<8xf32>
    %49 = vector.multi_reduction <maximumf>, %48, %cst_21 [1] : vector<8x8xf32> to vector<8xf32>
    %50 = vector.shape_cast %49 : vector<8xf32> to vector<8x1xf32>
    %51 = vector.broadcast %50 : vector<8x1xf32> to vector<8x8xf32>
    %52 = arith.subf %48, %51 : vector<8x8xf32>
    %53 = math.exp %52 : vector<8x8xf32>
    %cst_22 = arith.constant dense<0.000000e+00> : vector<8xf32>
    %54 = vector.multi_reduction <add>, %53, %cst_22 [1] : vector<8x8xf32> to vector<8xf32>
    %55 = vector.shape_cast %54 : vector<8xf32> to vector<8x1xf32>
    %56 = vector.broadcast %55 : vector<8x1xf32> to vector<8x8xf32>
    %57 = arith.divf %53, %56 : vector<8x8xf32>
    %cst_23 = arith.constant dense<0.000000e+00> : vector<8x8xf32>
    %58 = tpu.matmul %57, %41, %cst_23 {dimension_numbers = #tpu.dot_dimension_numbers<[1], [0], [0], [1], [0, 0, 1, 1], [], []>} : vector<8x8xf32>, vector<8x8xf32>, vector<8x8xf32> -> vector<8x8xf32>
    %59 = vector.extract_strided_slice %37 {offsets = [0, 0], sizes = [8, 32], strides = [1, 1]} : vector<32x32xf32> to vector<8x32xf32>
    %cst_24 = arith.constant dense<0.000000e+00> : vector<8x32xf32>
    %60 = tpu.matmul %58, %59, %cst_24 {dimension_numbers = #tpu.dot_dimension_numbers<[1], [0], [0], [1], [0, 0, 1, 1], [], []>} : vector<8x8xf32>, vector<8x32xf32>, vector<8x32xf32> -> vector<8x32xf32>
    %61 = arith.addf %38, %60 : vector<8x32xf32>
    %62 = vector.extract_strided_slice %29 {offsets = [0, 8], sizes = [8, 8], strides = [1, 1]} : vector<8x32xf32> to vector<8x8xf32>
    %63 = vector.extract_strided_slice %30 {offsets = [0, 8], sizes = [8, 8], strides = [1, 1]} : vector<8x32xf32> to vector<8x8xf32>
    %64 = vector.extract_strided_slice %31 {offsets = [0, 8], sizes = [8, 8], strides = [1, 1]} : vector<8x32xf32> to vector<8x8xf32>
    %cst_25 = arith.constant dense<0.000000e+00> : vector<8x8xf32>
    %65 = tpu.matmul %62, %63, %cst_25 {dimension_numbers = #tpu.dot_dimension_numbers<[1], [1], [0], [0], [0, 0, 1, 0], [], []>} : vector<8x8xf32>, vector<8x8xf32>, vector<8x8xf32> -> vector<8x8xf32>
    %66 = arith.mulf %65, %36 : vector<8x8xf32>
    %cst_26 = arith.constant 1.000000e+00 : f32
    %67 = vector.broadcast %cst_26 : f32 to vector<8x8xf32>
    %68 = arith.subf %67, %36 : vector<8x8xf32>
    %cst_27 = arith.constant 1.000000e+10 : f32
    %69 = vector.broadcast %cst_27 : f32 to vector<8x8xf32>
    %70 = arith.mulf %69, %68 : vector<8x8xf32>
    %71 = arith.subf %66, %70 : vector<8x8xf32>
    %cst_28 = arith.constant dense<0xFF800000> : vector<8xf32>
    %72 = vector.multi_reduction <maximumf>, %71, %cst_28 [1] : vector<8x8xf32> to vector<8xf32>
    %73 = vector.shape_cast %72 : vector<8xf32> to vector<8x1xf32>
    %74 = vector.broadcast %73 : vector<8x1xf32> to vector<8x8xf32>
    %75 = arith.subf %71, %74 : vector<8x8xf32>
    %76 = math.exp %75 : vector<8x8xf32>
    %cst_29 = arith.constant dense<0.000000e+00> : vector<8xf32>
    %77 = vector.multi_reduction <add>, %76, %cst_29 [1] : vector<8x8xf32> to vector<8xf32>
    %78 = vector.shape_cast %77 : vector<8xf32> to vector<8x1xf32>
    %79 = vector.broadcast %78 : vector<8x1xf32> to vector<8x8xf32>
    %80 = arith.divf %76, %79 : vector<8x8xf32>
    %cst_30 = arith.constant dense<0.000000e+00> : vector<8x8xf32>
    %81 = tpu.matmul %80, %64, %cst_30 {dimension_numbers = #tpu.dot_dimension_numbers<[1], [0], [0], [1], [0, 0, 1, 1], [], []>} : vector<8x8xf32>, vector<8x8xf32>, vector<8x8xf32> -> vector<8x8xf32>
    %82 = vector.extract_strided_slice %37 {offsets = [8, 0], sizes = [8, 32], strides = [1, 1]} : vector<32x32xf32> to vector<8x32xf32>
    %cst_31 = arith.constant dense<0.000000e+00> : vector<8x32xf32>
    %83 = tpu.matmul %81, %82, %cst_31 {dimension_numbers = #tpu.dot_dimension_numbers<[1], [0], [0], [1], [0, 0, 1, 1], [], []>} : vector<8x8xf32>, vector<8x32xf32>, vector<8x32xf32> -> vector<8x32xf32>
    %84 = arith.addf %61, %83 : vector<8x32xf32>
    %85 = vector.extract_strided_slice %29 {offsets = [0, 16], sizes = [8, 8], strides = [1, 1]} : vector<8x32xf32> to vector<8x8xf32>
    %86 = vector.extract_strided_slice %30 {offsets = [0, 16], sizes = [8, 8], strides = [1, 1]} : vector<8x32xf32> to vector<8x8xf32>
    %87 = vector.extract_strided_slice %31 {offsets = [0, 16], sizes = [8, 8], strides = [1, 1]} : vector<8x32xf32> to vector<8x8xf32>
    %cst_32 = arith.constant dense<0.000000e+00> : vector<8x8xf32>
    %88 = tpu.matmul %85, %86, %cst_32 {dimension_numbers = #tpu.dot_dimension_numbers<[1], [1], [0], [0], [0, 0, 1, 0], [], []>} : vector<8x8xf32>, vector<8x8xf32>, vector<8x8xf32> -> vector<8x8xf32>
    %89 = arith.mulf %88, %36 : vector<8x8xf32>
    %cst_33 = arith.constant 1.000000e+00 : f32
    %90 = vector.broadcast %cst_33 : f32 to vector<8x8xf32>
    %91 = arith.subf %90, %36 : vector<8x8xf32>
    %cst_34 = arith.constant 1.000000e+10 : f32
    %92 = vector.broadcast %cst_34 : f32 to vector<8x8xf32>
    %93 = arith.mulf %92, %91 : vector<8x8xf32>
    %94 = arith.subf %89, %93 : vector<8x8xf32>
    %cst_35 = arith.constant dense<0xFF800000> : vector<8xf32>
    %95 = vector.multi_reduction <maximumf>, %94, %cst_35 [1] : vector<8x8xf32> to vector<8xf32>
    %96 = vector.shape_cast %95 : vector<8xf32> to vector<8x1xf32>
    %97 = vector.broadcast %96 : vector<8x1xf32> to vector<8x8xf32>
    %98 = arith.subf %94, %97 : vector<8x8xf32>
    %99 = math.exp %98 : vector<8x8xf32>
    %cst_36 = arith.constant dense<0.000000e+00> : vector<8xf32>
    %100 = vector.multi_reduction <add>, %99, %cst_36 [1] : vector<8x8xf32> to vector<8xf32>
    %101 = vector.shape_cast %100 : vector<8xf32> to vector<8x1xf32>
    %102 = vector.broadcast %101 : vector<8x1xf32> to vector<8x8xf32>
    %103 = arith.divf %99, %102 : vector<8x8xf32>
    %cst_37 = arith.constant dense<0.000000e+00> : vector<8x8xf32>
    %104 = tpu.matmul %103, %87, %cst_37 {dimension_numbers = #tpu.dot_dimension_numbers<[1], [0], [0], [1], [0, 0, 1, 1], [], []>} : vector<8x8xf32>, vector<8x8xf32>, vector<8x8xf32> -> vector<8x8xf32>
    %105 = vector.extract_strided_slice %37 {offsets = [16, 0], sizes = [8, 32], strides = [1, 1]} : vector<32x32xf32> to vector<8x32xf32>
    %cst_38 = arith.constant dense<0.000000e+00> : vector<8x32xf32>
    %106 = tpu.matmul %104, %105, %cst_38 {dimension_numbers = #tpu.dot_dimension_numbers<[1], [0], [0], [1], [0, 0, 1, 1], [], []>} : vector<8x8xf32>, vector<8x32xf32>, vector<8x32xf32> -> vector<8x32xf32>
    %107 = arith.addf %84, %106 : vector<8x32xf32>
    %108 = vector.extract_strided_slice %29 {offsets = [0, 24], sizes = [8, 8], strides = [1, 1]} : vector<8x32xf32> to vector<8x8xf32>
    %109 = vector.extract_strided_slice %30 {offsets = [0, 24], sizes = [8, 8], strides = [1, 1]} : vector<8x32xf32> to vector<8x8xf32>
    %110 = vector.extract_strided_slice %31 {offsets = [0, 24], sizes = [8, 8], strides = [1, 1]} : vector<8x32xf32> to vector<8x8xf32>
    %cst_39 = arith.constant dense<0.000000e+00> : vector<8x8xf32>
    %111 = tpu.matmul %108, %109, %cst_39 {dimension_numbers = #tpu.dot_dimension_numbers<[1], [1], [0], [0], [0, 0, 1, 0], [], []>} : vector<8x8xf32>, vector<8x8xf32>, vector<8x8xf32> -> vector<8x8xf32>
    %112 = arith.mulf %111, %36 : vector<8x8xf32>
    %cst_40 = arith.constant 1.000000e+00 : f32
    %113 = vector.broadcast %cst_40 : f32 to vector<8x8xf32>
    %114 = arith.subf %113, %36 : vector<8x8xf32>
    %cst_41 = arith.constant 1.000000e+10 : f32
    %115 = vector.broadcast %cst_41 : f32 to vector<8x8xf32>
    %116 = arith.mulf %115, %114 : vector<8x8xf32>
    %117 = arith.subf %112, %116 : vector<8x8xf32>
    %cst_42 = arith.constant dense<0xFF800000> : vector<8xf32>
    %118 = vector.multi_reduction <maximumf>, %117, %cst_42 [1] : vector<8x8xf32> to vector<8xf32>
    %119 = vector.shape_cast %118 : vector<8xf32> to vector<8x1xf32>
    %120 = vector.broadcast %119 : vector<8x1xf32> to vector<8x8xf32>
    %121 = arith.subf %117, %120 : vector<8x8xf32>
    %122 = math.exp %121 : vector<8x8xf32>
    %cst_43 = arith.constant dense<0.000000e+00> : vector<8xf32>
    %123 = vector.multi_reduction <add>, %122, %cst_43 [1] : vector<8x8xf32> to vector<8xf32>
    %124 = vector.shape_cast %123 : vector<8xf32> to vector<8x1xf32>
    %125 = vector.broadcast %124 : vector<8x1xf32> to vector<8x8xf32>
    %126 = arith.divf %122, %125 : vector<8x8xf32>
    %cst_44 = arith.constant dense<0.000000e+00> : vector<8x8xf32>
    %127 = tpu.matmul %126, %110, %cst_44 {dimension_numbers = #tpu.dot_dimension_numbers<[1], [0], [0], [1], [0, 0, 1, 1], [], []>} : vector<8x8xf32>, vector<8x8xf32>, vector<8x8xf32> -> vector<8x8xf32>
    %128 = vector.extract_strided_slice %37 {offsets = [24, 0], sizes = [8, 32], strides = [1, 1]} : vector<32x32xf32> to vector<8x32xf32>
    %cst_45 = arith.constant dense<0.000000e+00> : vector<8x32xf32>
    %129 = tpu.matmul %127, %128, %cst_45 {dimension_numbers = #tpu.dot_dimension_numbers<[1], [0], [0], [1], [0, 0, 1, 1], [], []>} : vector<8x8xf32>, vector<8x32xf32>, vector<8x32xf32> -> vector<8x32xf32>
    %130 = arith.addf %107, %129 : vector<8x32xf32>
    %c0_46 = arith.constant 0 : index
    %c0_47 = arith.constant 0 : index
    %131 = vector.load %arg7[%c0_46, %c0_47] : memref<1x32xf32, #tpu.memory_space<vmem>>, vector<1x32xf32>
    %132 = vector.broadcast %131 : vector<1x32xf32> to vector<8x32xf32>
    %133 = arith.addf %130, %132 : vector<8x32xf32>
    %134 = arith.addf %1, %133 : vector<8x32xf32>
    %c0_48 = arith.constant 0 : index
    %c0_49 = arith.constant 0 : index
    %c0_50 = arith.constant 0 : index
    %135 = vector.load %arg8[%c0_48, %c0_49, %c0_50] : memref<1x8x32xf32, #tpu.memory_space<vmem>>, vector<1x8x32xf32>
    %136 = vector.shape_cast %135 : vector<1x8x32xf32> to vector<8x32xf32>
    %137 = vector.shape_cast %134 : vector<8x32xf32> to vector<1x8x32xf32>
    tpu.vector_store %arg8[%c0_48, %c0_49, %c0_50], %137 {strides = array<i32>} : memref<1x8x32xf32, #tpu.memory_space<vmem>>, vector<1x8x32xf32>,
    %c0_51 = arith.constant 0 : index
    %c0_52 = arith.constant 0 : index
    %c0_53 = arith.constant 0 : index
    %138 = vector.load %arg9[%c0_51, %c0_52, %c0_53] : memref<1x8x32xf32, #tpu.memory_space<vmem>>, vector<1x8x32xf32>
    %139 = vector.shape_cast %138 : vector<1x8x32xf32> to vector<8x32xf32>
    %140 = vector.shape_cast %30 : vector<8x32xf32> to vector<1x8x32xf32>
    tpu.vector_store %arg9[%c0_51, %c0_52, %c0_53], %140 {strides = array<i32>} : memref<1x8x32xf32, #tpu.memory_space<vmem>>, vector<1x8x32xf32>,
    %c0_54 = arith.constant 0 : index
    %c0_55 = arith.constant 0 : index
    %c0_56 = arith.constant 0 : index
    %141 = vector.load %arg10[%c0_54, %c0_55, %c0_56] : memref<1x8x32xf32, #tpu.memory_space<vmem>>, vector<1x8x32xf32>
    %142 = vector.shape_cast %141 : vector<1x8x32xf32> to vector<8x32xf32>
    %143 = vector.shape_cast %31 : vector<8x32xf32> to vector<1x8x32xf32>
    tpu.vector_store %arg10[%c0_54, %c0_55, %c0_56], %143 {strides = array<i32>} : memref<1x8x32xf32, #tpu.memory_space<vmem>>, vector<1x8x32xf32>,
    return
  }
  func.func @transform_0(%arg0: i32) -> (i32, i32, i32) {
    %c0_i32 = arith.constant 0 : i32
    %c0_i32_0 = arith.constant 0 : i32
    %c0_i32_1 = arith.constant 0 : i32
    return %arg0, %c0_i32, %c0_i32_0 : i32, i32, i32
  }
  func.func @transform_1(%arg0: i32) -> (i32, i32) {
    %c0_i32 = arith.constant 0 : i32
    %c0_i32_0 = arith.constant 0 : i32
    %c0_i32_1 = arith.constant 0 : i32
    return %c0_i32, %c0_i32_0 : i32, i32
  }
  func.func @transform_2(%arg0: i32) -> (i32, i32) {
    %c0_i32 = arith.constant 0 : i32
    %c0_i32_0 = arith.constant 0 : i32
    %c0_i32_1 = arith.constant 0 : i32
    return %c0_i32, %c0_i32_0 : i32, i32
  }
  func.func @transform_3(%arg0: i32) -> (i32, i32) {
    %c0_i32 = arith.constant 0 : i32
    %c0_i32_0 = arith.constant 0 : i32
    %c0_i32_1 = arith.constant 0 : i32
    return %c0_i32, %c0_i32_0 : i32, i32
  }
  func.func @transform_4(%arg0: i32) -> (i32, i32) {
    %c0_i32 = arith.constant 0 : i32
    %c0_i32_0 = arith.constant 0 : i32
    %c0_i32_1 = arith.constant 0 : i32
    return %c0_i32, %c0_i32_0 : i32, i32
  }
  func.func @transform_5(%arg0: i32) -> (i32, i32) {
    %c0_i32 = arith.constant 0 : i32
    %c0_i32_0 = arith.constant 0 : i32
    %c0_i32_1 = arith.constant 0 : i32
    return %c0_i32, %c0_i32_0 : i32, i32
  }
  func.func @transform_6(%arg0: i32) -> (i32, i32) {
    %c0_i32 = arith.constant 0 : i32
    %c0_i32_0 = arith.constant 0 : i32
    %c0_i32_1 = arith.constant 0 : i32
    return %c0_i32, %c0_i32_0 : i32, i32
  }
  func.func @transform_7(%arg0: i32) -> (i32, i32, i32) {
    %c0_i32 = arith.constant 0 : i32
    %c0_i32_0 = arith.constant 0 : i32
    %c0_i32_1 = arith.constant 0 : i32
    return %arg0, %c0_i32, %c0_i32_0 : i32, i32, i32
  }
  func.func @transform_8(%arg0: i32) -> (i32, i32, i32) {
    %c0_i32 = arith.constant 0 : i32
    %c0_i32_0 = arith.constant 0 : i32
    %c0_i32_1 = arith.constant 0 : i32
    return %arg0, %c0_i32, %c0_i32_0 : i32, i32, i32
  }
  func.func @transform_9(%arg0: i32) -> (i32, i32, i32) {
    %c0_i32 = arith.constant 0 : i32
    %c0_i32_0 = arith.constant 0 : i32
    %c0_i32_1 = arith.constant 0 : i32
    return %arg0, %c0_i32, %c0_i32_0 : i32, i32, i32
  }
}

</mosaic_0001>

<llo_original>
// kernel: tpu_custom_call.1
$region0: #{tpu_custom_call.1}
  #allocation0 [shape = 'u32[]', space=smem, size = 0x4, offset = 0x4, fixed_abs, tag = 'smem constant byte address 0x4 - core index']
  #allocation1 [shape = 'u32[72,128]{1,0:T(1,128)}', space=vmem, size = 0x9000, scoped, tag = 'internal scratch']
  %s0 = inlined_call_operand.hbm [shape: f32[2,8,32], index: 0, kind: input, shape index: {}]
  %s1 = inlined_call_operand.hbm [shape: f32[1,32], index: 1, kind: input, shape index: {}]
  %s2 = inlined_call_operand.vmem [shape: f32[1,32], index: 2, kind: input, shape index: {}]
  %s3 = inlined_call_operand.hbm [shape: f32[32,96], index: 3, kind: input, shape index: {}]
  %s4 = inlined_call_operand.vmem [shape: f32[1,96], index: 4, kind: input, shape index: {}]
  %s5 = inlined_call_operand.hbm [shape: f32[32,32], index: 5, kind: input, shape index: {}]
  %s6 = inlined_call_operand.vmem [shape: f32[1,32], index: 6, kind: input, shape index: {}]
  %s7 = inlined_call_operand.hbm [shape: f32[2,8,32], index: 7, kind: output, shape index: {0}]
  %s8 = inlined_call_operand.hbm [shape: f32[2,8,32], index: 8, kind: output, shape index: {1}]
  %s9 = inlined_call_operand.hbm [shape: f32[2,8,32], index: 9, kind: output, shape index: {2}]
  %10 = xla_tuple %s7, %s8, %s9
  %s11 = sld [smem:[#allocation0]]
  $region93: #{tpu_custom_call.1} parent=0
    _
  %s13 = ssub.s32 1, %s11
  %s14 = scalar_select 0, %s13, %s11
  $region1: #{tpu_custom_call.1} parent=0
    #allocation2 [shape = 'u8[8192]{0}', space=vmem, size = 0x2000, scoped, tag = 'input window, operand 0']
    #allocation3 [shape = 's32[2]{0}', space=sflag, size = 0x8, scoped, tag = 'scoped memory for tpu_custom_call.1']
    #allocation4 [shape = 's32[2]{0}', space=sflag, size = 0x8, scoped, tag = 'scoped memory for tpu_custom_call.1']
    #allocation5 [shape = 'u8[512]{0}', space=vmem, size = 0x400, scoped, tag = 'input window, operand 1, single buffered']
    #allocation6 [shape = 's32[1]{0}', space=sflag, size = 0x4, scoped, tag = 'scoped memory for tpu_custom_call.1']
    #allocation7 [shape = 'u8[16384]{0}', space=vmem, size = 0x4000, scoped, tag = 'input window, operand 3, single buffered']
    #allocation8 [shape = 'u8[16384]{0}', space=vmem, size = 0x4000, scoped, tag = 'input window, operand 5, single buffered']
    #allocation9 [shape = 's32[1]{0}', space=sflag, size = 0x4, scoped, tag = 'scoped memory for tpu_custom_call.1']
    #allocation10 [shape = 'u8[8192]{0}', space=vmem, size = 0x2000, scoped, tag = 'output window, operand 0']
    #allocation11 [shape = 'u8[8192]{0}', space=vmem, size = 0x2000, scoped, tag = 'output window, operand 1']
    #allocation12 [shape = 's32[2]{0}', space=sflag, size = 0x8, scoped, tag = 'scoped memory for tpu_custom_call.1']
    #allocation13 [shape = 'u8[8192]{0}', space=vmem, size = 0x2000, scoped, tag = 'output window, operand 2']
    %15 = vsyncpa [#allocation3], 0
    %s16 = scalar_lea.sflag [#allocation3], 1
    %17 = vsyncpa %s16, 0
    %18 = vsyncpa [#allocation6], 0
    %19 = vsyncpa [#allocation9], 0
    %20 = vsyncpa [#allocation4], 0
    %s21 = scalar_lea.sflag [#allocation4], 1
    %22 = vsyncpa %s21, 0
    %23 = vsyncpa [#allocation12], 0
    %s24 = scalar_lea.sflag [#allocation12], 1
    %25 = vsyncpa %s24, 0
    loop: start=0, step=1, limit=4
    $region2: #{tpu_custom_call.1} parent=1 // loop_pre_header
      _
    $region3: #{tpu_custom_call.1} parent=1 // loop_header
      %s27 = sphi 0, %s31
      %p28 = scmp.ge.s32.totalorder %s27, 4
      %s37 = sphi 0, %s39
      %s40 = sphi 0, %s37
      %s41 = sphi 0, %s40
      %s57 = sphi 0, %s41
      %s61 = sphi 0, %s61
      %s63 = sphi 0, %s61
      %s64 = sphi 0, %s63
      %s78 = sphi 0, %s64
      %s82 = sphi 0, %s82
      %s84 = sphi 0, %s82
      %s85 = sphi 0, %s84
      %s99 = sphi 0, %s85
      %s103 = sphi 0, %s103
      %s105 = sphi 0, %s103
      %s106 = sphi 0, %s105
      %s120 = sphi 0, %s106
      %s124 = sphi 0, %s124
      %s126 = sphi 0, %s124
      %s127 = sphi 0, %s126
      %s141 = sphi 0, %s127
      %s145 = sphi 0, %s145
      %s147 = sphi 0, %s145
      %s148 = sphi 0, %s147
      %s162 = sphi 0, %s148
      %s166 = sphi 0, %s166
      %s168 = sphi 0, %s166
      %s169 = sphi 0, %s168
      %s183 = sphi 0, %s169
      %s189 = sphi 0, %s191
      %s192 = sphi 0, %s189
      %s193 = sphi 0, %s192
      %s209 = sphi 0, %s193
      %s215 = sphi 0, %s217
      %s218 = sphi 0, %s215
      %s219 = sphi 0, %s218
      %s235 = sphi 0, %s219
      %s241 = sphi 0, %s243
      %s244 = sphi 0, %s241
      %s245 = sphi 0, %s244
      %s261 = sphi 0, %s245
    $region4: #{tpu_custom_call.1} parent=1 // loop_header_branch
      %30 = sbr.rel (%p28) target = $region8
    $region5: #{tpu_custom_call.1} parent=1 // loop_body
      %s32 = ssub.s32 %s27, 1
      %s33 = ssub.s32 %s27, 2
      %s34 = sadd.s32 %s27, 1
      %s35 = ssub.s32 %s27, %s34
      %p36 = scmp.eq.s32.totalorder %s35, 0
      %s38 = sadd.s32 %s37, 1
      %s39 = scalar_select %p36, %s37, %s38
      %p42 = pneg %p36
      %p43 = scmp.eq.s32.totalorder %s27, 1
      %p44 = por %p42, %p43
      %p45 = scmp.ne.s32.totalorder %s37, %s40
      %p46 = scmp.eq.s32.totalorder %s27, 0
      %p47 = por %p45, %p46
      %p48 = scmp.ne.s32.totalorder %s37, %s40
      %p49 = scmp.eq.s32.totalorder %s32, 1
      %p50 = por %p48, %p49
      %p51 = scmp.ne.s32.totalorder %s40, %s41
      %p52 = scmp.eq.s32.totalorder %s32, 0
      %p53 = por %p51, %p52
      %p54 = scmp.ne.s32.totalorder %s40, %s41
      %p55 = scmp.eq.s32.totalorder %s33, 1
      %p56 = por %p54, %p55
      %p58 = scmp.ne.s32.totalorder %s41, %s57
      %p59 = scmp.eq.s32.totalorder %s33, 0
      %p60 = por %p58, %p59
      %s62 = sadd.s32 %s61, 1
      %p65 = scmp.eq.s32.totalorder %s27, 1
      %p66 = scmp.ne.s32.totalorder %s61, %s63
      %p67 = scmp.eq.s32.totalorder %s27, 0
      %p68 = por %p66, %p67
      %p69 = scmp.ne.s32.totalorder %s61, %s63
      %p70 = scmp.eq.s32.totalorder %s32, 1
      %p71 = por %p69, %p70
      %p72 = scmp.ne.s32.totalorder %s63, %s64
      %p73 = scmp.eq.s32.totalorder %s32, 0
      %p74 = por %p72, %p73
      %p75 = scmp.ne.s32.totalorder %s63, %s64
      %p76 = scmp.eq.s32.totalorder %s33, 1
      %p77 = por %p75, %p76
      %p79 = scmp.ne.s32.totalorder %s64, %s78
      %p80 = scmp.eq.s32.totalorder %s33, 0
      %p81 = por %p79, %p80
      %s83 = sadd.s32 %s82, 1
      %p86 = scmp.eq.s32.totalorder %s27, 1
      %p87 = scmp.ne.s32.totalorder %s82, %s84
      %p88 = scmp.eq.s32.totalorder %s27, 0
      %p89 = por %p87, %p88
      %p90 = scmp.ne.s32.totalorder %s82, %s84
      %p91 = scmp.eq.s32.totalorder %s32, 1
      %p92 = por %p90, %p91
      %p93 = scmp.ne.s32.totalorder %s84, %s85
      %p94 = scmp.eq.s32.totalorder %s32, 0
      %p95 = por %p93, %p94
      %p96 = scmp.ne.s32.totalorder %s84, %s85
      %p97 = scmp.eq.s32.totalorder %s33, 1
      %p98 = por %p96, %p97
      %p100 = scmp.ne.s32.totalorder %s85, %s99
      %p101 = scmp.eq.s32.totalorder %s33, 0
      %p102 = por %p100, %p101
      %s104 = sadd.s32 %s103, 1
      %p107 = scmp.eq.s32.totalorder %s27, 1
      %p108 = scmp.ne.s32.totalorder %s103, %s105
      %p109 = scmp.eq.s32.totalorder %s27, 0
      %p110 = por %p108, %p109
      %p111 = scmp.ne.s32.totalorder %s103, %s105
      %p112 = scmp.eq.s32.totalorder %s32, 1
      %p113 = por %p111, %p112
      %p114 = scmp.ne.s32.totalorder %s105, %s106
      %p115 = scmp.eq.s32.totalorder %s32, 0
      %p116 = por %p114, %p115
      %p117 = scmp.ne.s32.totalorder %s105, %s106
      %p118 = scmp.eq.s32.totalorder %s33, 1
      %p119 = por %p117, %p118
      %p121 = scmp.ne.s32.totalorder %s106, %s120
      %p122 = scmp.eq.s32.totalorder %s33, 0
      %p123 = por %p121, %p122
      %s125 = sadd.s32 %s124, 1
      %p128 = scmp.eq.s32.totalorder %s27, 1
      %p129 = scmp.ne.s32.totalorder %s124, %s126
      %p130 = scmp.eq.s32.totalorder %s27, 0
      %p131 = por %p129, %p130
      %p132 = scmp.ne.s32.totalorder %s124, %s126
      %p133 = scmp.eq.s32.totalorder %s32, 1
      %p134 = por %p132, %p133
      %p135 = scmp.ne.s32.totalorder %s126, %s127
      %p136 = scmp.eq.s32.totalorder %s32, 0
      %p137 = por %p135, %p136
      %p138 = scmp.ne.s32.totalorder %s126, %s127
      %p139 = scmp.eq.s32.totalorder %s33, 1
      %p140 = por %p138, %p139
      %p142 = scmp.ne.s32.totalorder %s127, %s141
      %p143 = scmp.eq.s32.totalorder %s33, 0
      %p144 = por %p142, %p143
      %s146 = sadd.s32 %s145, 1
      %p149 = scmp.eq.s32.totalorder %s27, 1
      %p150 = scmp.ne.s32.totalorder %s145, %s147
      %p151 = scmp.eq.s32.totalorder %s27, 0
      %p152 = por %p150, %p151
      %p153 = scmp.ne.s32.totalorder %s145, %s147
      %p154 = scmp.eq.s32.totalorder %s32, 1
      %p155 = por %p153, %p154
      %p156 = scmp.ne.s32.totalorder %s147, %s148
      %p157 = scmp.eq.s32.totalorder %s32, 0
      %p158 = por %p156, %p157
      %p159 = scmp.ne.s32.totalorder %s147, %s148
      %p160 = scmp.eq.s32.totalorder %s33, 1
      %p161 = por %p159, %p160
      %p163 = scmp.ne.s32.totalorder %s148, %s162
      %p164 = scmp.eq.s32.totalorder %s33, 0
      %p165 = por %p163, %p164
      %s167 = sadd.s32 %s166, 1
      %p170 = scmp.eq.s32.totalorder %s27, 1
      %p171 = scmp.ne.s32.totalorder %s166, %s168
      %p172 = scmp.eq.s32.totalorder %s27, 0
      %p173 = por %p171, %p172
      %p174 = scmp.ne.s32.totalorder %s166, %s168
      %p175 = scmp.eq.s32.totalorder %s32, 1
      %p176 = por %p174, %p175
      %p177 = scmp.ne.s32.totalorder %s168, %s169
      %p178 = scmp.eq.s32.totalorder %s32, 0
      %p179 = por %p177, %p178
      %p180 = scmp.ne.s32.totalorder %s168, %s169
      %p181 = scmp.eq.s32.totalorder %s33, 1
      %p182 = por %p180, %p181
      %p184 = scmp.ne.s32.totalorder %s169, %s183
      %p185 = scmp.eq.s32.totalorder %s33, 0
      %p186 = por %p184, %p185
      %s187 = ssub.s32 %s27, %s34
      %p188 = scmp.eq.s32.totalorder %s187, 0
      %s190 = sadd.s32 %s189, 1
      %s191 = scalar_select %p188, %s189, %s190
      %p194 = pneg %p188
      %p195 = scmp.eq.s32.totalorder %s27, 1
      %p196 = por %p194, %p195
      %p197 = scmp.ne.s32.totalorder %s189, %s192
      %p198 = scmp.eq.s32.totalorder %s27, 0
      %p199 = por %p197, %p198
      %p200 = scmp.ne.s32.totalorder %s189, %s192
      %p201 = scmp.eq.s32.totalorder %s32, 1
      %p202 = por %p200, %p201
      %p203 = scmp.ne.s32.totalorder %s192, %s193
      %p204 = scmp.eq.s32.totalorder %s32, 0
      %p205 = por %p203, %p204
      %p206 = scmp.ne.s32.totalorder %s192, %s193
      %p207 = scmp.eq.s32.totalorder %s33, 1
      %p208 = por %p206, %p207
      %p210 = scmp.ne.s32.totalorder %s193, %s209
      %p211 = scmp.eq.s32.totalorder %s33, 0
      %p212 = por %p210, %p211
      %s213 = ssub.s32 %s27, %s34
      %p214 = scmp.eq.s32.totalorder %s213, 0
      %s216 = sadd.s32 %s215, 1
      %s217 = scalar_select %p214, %s215, %s216
      %p220 = pneg %p214
      %p221 = scmp.eq.s32.totalorder %s27, 1
      %p222 = por %p220, %p221
      %p223 = scmp.ne.s32.totalorder %s215, %s218
      %p224 = scmp.eq.s32.totalorder %s27, 0
      %p225 = por %p223, %p224
      %p226 = scmp.ne.s32.totalorder %s215, %s218
      %p227 = scmp.eq.s32.totalorder %s32, 1
      %p228 = por %p226, %p227
      %p229 = scmp.ne.s32.totalorder %s218, %s219
      %p230 = scmp.eq.s32.totalorder %s32, 0
      %p231 = por %p229, %p230
      %p232 = scmp.ne.s32.totalorder %s218, %s219
      %p233 = scmp.eq.s32.totalorder %s33, 1
      %p234 = por %p232, %p233
      %p236 = scmp.ne.s32.totalorder %s219, %s235
      %p237 = scmp.eq.s32.totalorder %s33, 0
      %p238 = por %p236, %p237
      %s239 = ssub.s32 %s27, %s34
      %p240 = scmp.eq.s32.totalorder %s239, 0
      %s242 = sadd.s32 %s241, 1
      %s243 = scalar_select %p240, %s241, %s242
      %p246 = pneg %p240
      %p247 = scmp.eq.s32.totalorder %s27, 1
      %p248 = por %p246, %p247
      %p249 = scmp.ne.s32.totalorder %s241, %s244
      %p250 = scmp.eq.s32.totalorder %s27, 0
      %p251 = por %p249, %p250
      %p252 = scmp.ne.s32.totalorder %s241, %s244
      %p253 = scmp.eq.s32.totalorder %s32, 1
      %p254 = por %p252, %p253
      %p255 = scmp.ne.s32.totalorder %s244, %s245
      %p256 = scmp.eq.s32.totalorder %s32, 0
      %p257 = por %p255, %p256
      %p258 = scmp.ne.s32.totalorder %s244, %s245
      %p259 = scmp.eq.s32.totalorder %s33, 1
      %p260 = por %p258, %p259
      %p262 = scmp.ne.s32.totalorder %s245, %s261
      %p263 = scmp.eq.s32.totalorder %s33, 0
      %p264 = por %p262, %p263
      %p265 = scmp.le.s32.totalorder 1, %s27
      %p266 = scmp.lt.s32.totalorder %s27, 3
      %p267 = pnand %p265, %p266
      %p268 = pneg %p267
      // Predicated region
      $region9: #{tpu_custom_call.1} parent=5 // pred_check
        _
      $region10: #{tpu_custom_call.1} parent=5 // pred_check_branch
        %270 = sbr.rel (%p267) target = $region12
      $region11: #{tpu_custom_call.1} parent=5 // pred_region
        %s271 = ssub.s32 %s27, 1
        // Predicated region
        $region13: #{tpu_custom_call.1} parent=11 // pred_check
          %p272 = pneg %p74
        $region14: #{tpu_custom_call.1} parent=11 // pred_check_branch
          %274 = sbr.rel (%p272) target = $region16
        $region15: #{tpu_custom_call.1} parent=11 // pred_region
          %276 = vsyncadd [#allocation6], 0
          %s278 = sshll.u32 %s1, 4
          %s279 = int_to_ptr.hbm [resolvable:$true] %s278
          %s280 = sshll.u32 [#allocation5], 4
          %s281 = int_to_ptr.vmem [resolvable:$true] %s280
          %283 = dma.hbm_to_vmem [thread:$0]  %s279, 16, %s281, [#allocation6]
        $region16: #{tpu_custom_call.1} parent=11 // pred_fallthru
          _
        // Predicated region
        $region17: #{tpu_custom_call.1} parent=11 // pred_check
          %p284 = pneg %p95
        $region18: #{tpu_custom_call.1} parent=11 // pred_check_branch
          %286 = sbr.rel (%p284) target = $region20
        $region19: #{tpu_custom_call.1} parent=11 // pred_region
          _
        $region20: #{tpu_custom_call.1} parent=11 // pred_fallthru
          _
        // Predicated region
        $region21: #{tpu_custom_call.1} parent=11 // pred_check
          %p287 = pneg %p116
        $region22: #{tpu_custom_call.1} parent=11 // pred_check_branch
          %289 = sbr.rel (%p287) target = $region24
        $region23: #{tpu_custom_call.1} parent=11 // pred_region
          %291 = vsyncadd [#allocation6], 0
          %s292 = sshll.u32 %s3, 4
          %s293 = int_to_ptr.hbm [resolvable:$true] %s292
          %s294 = sshll.u32 [#allocation7], 4
          %s295 = int_to_ptr.vmem [resolvable:$true] %s294
          %300 = dma.hbm_to_vmem [thread:$0]  %s293, 512, %s295, [#allocation6], 128, 128, 8
        $region24: #{tpu_custom_call.1} parent=11 // pred_fallthru
          _
        // Predicated region
        $region25: #{tpu_custom_call.1} parent=11 // pred_check
          %p301 = pneg %p137
        $region26: #{tpu_custom_call.1} parent=11 // pred_check_branch
          %303 = sbr.rel (%p301) target = $region28
        $region27: #{tpu_custom_call.1} parent=11 // pred_region
          _
        $region28: #{tpu_custom_call.1} parent=11 // pred_fallthru
          _
        // Predicated region
        $region29: #{tpu_custom_call.1} parent=11 // pred_check
          %p304 = pneg %p158
        $region30: #{tpu_custom_call.1} parent=11 // pred_check_branch
          %306 = sbr.rel (%p304) target = $region32
        $region31: #{tpu_custom_call.1} parent=11 // pred_region
          %308 = vsyncadd [#allocation9], 0
          %s309 = sshll.u32 %s5, 4
          %s310 = int_to_ptr.hbm [resolvable:$true] %s309
          %s311 = sshll.u32 [#allocation8], 4
          %s312 = int_to_ptr.vmem [resolvable:$true] %s311
          %317 = dma.hbm_to_vmem [thread:$0]  %s310, 512, %s312, [#allocation9], 128, 128, 8
        $region32: #{tpu_custom_call.1} parent=11 // pred_fallthru
          _
        // Predicated region
        $region33: #{tpu_custom_call.1} parent=11 // pred_check
          %p318 = pneg %p179
        $region34: #{tpu_custom_call.1} parent=11 // pred_check_branch
          %320 = sbr.rel (%p318) target = $region36
        $region35: #{tpu_custom_call.1} parent=11 // pred_region
          _
        $region36: #{tpu_custom_call.1} parent=11 // pred_fallthru
          _
      $region12: #{tpu_custom_call.1} parent=5 // pred_fallthru
        _
      %p321 = scmp.lt.s32.totalorder %s27, 2
      // Predicated region
      $region37: #{tpu_custom_call.1} parent=5 // pred_check
        %p322 = pneg %p321
      $region38: #{tpu_custom_call.1} parent=5 // pred_check_branch
        %324 = sbr.rel (%p322) target = $region40
      $region39: #{tpu_custom_call.1} parent=5 // pred_region
        // Predicated region
        $region41: #{tpu_custom_call.1} parent=39 // pred_check
          %p325 = pneg %p47
        $region42: #{tpu_custom_call.1} parent=39 // pred_check_branch
          %327 = sbr.rel (%p325) target = $region44
        $region43: #{tpu_custom_call.1} parent=39 // pred_region
          %s328 = sand.u32 %s37, 1
          %s329 = scalar_lea.sflag [#allocation3], %s328
          %s330 = sand.u32 %s37, 1
          %s331 = smul.addr %s330, 8
          %s332 = scalar_lea.vmem [#allocation2], %s331
          %334 = vsyncadd %s329, 0
          %s335 = smul.addr %s27, 8
          %s336 = scalar_lea.hbm %s0, %s335
          %s338 = sshll.u32 %s336, 4
          %s339 = int_to_ptr.hbm [resolvable:$true] %s338
          %s340 = sshll.u32 %s332, 4
          %s341 = int_to_ptr.vmem [resolvable:$true] %s340
          %343 = dma.hbm_to_vmem [thread:$0]  %s339, 128, %s341, %s329
        $region44: #{tpu_custom_call.1} parent=39 // pred_fallthru
          _
      $region40: #{tpu_custom_call.1} parent=5 // pred_fallthru
        _
      %p344 = scmp.le.s32.totalorder 1, %s27
      %p345 = scmp.lt.s32.totalorder %s27, 3
      %p346 = pnand %p344, %p345
      %p347 = pneg %p346
      // Predicated region
      $region45: #{tpu_custom_call.1} parent=5 // pred_check
        _
      $region46: #{tpu_custom_call.1} parent=5 // pred_check_branch
        %349 = sbr.rel (%p346) target = $region48
      $region47: #{tpu_custom_call.1} parent=5 // pred_region
        %s350 = ssub.s32 %s27, 1
        %s351 = sand.u32 %s40, 1
        %s352 = scalar_lea.sflag [#allocation3], %s351
        %s353 = sand.u32 %s40, 1
        %s354 = smul.addr %s353, 8
        %s355 = scalar_lea.vmem [#allocation2], %s354
        // Predicated region
        $region49: #{tpu_custom_call.1} parent=47 // pred_check
          %p356 = pneg %p53
        $region50: #{tpu_custom_call.1} parent=47 // pred_check_branch
          %358 = sbr.rel (%p356) target = $region52
        $region51: #{tpu_custom_call.1} parent=47 // pred_region
          %360 = dma.done %s352, 128
        $region52: #{tpu_custom_call.1} parent=47 // pred_fallthru
          _
        // Predicated region
        $region53: #{tpu_custom_call.1} parent=47 // pred_check
          %p361 = pneg %p74
        $region54: #{tpu_custom_call.1} parent=47 // pred_check_branch
          %363 = sbr.rel (%p361) target = $region56
        $region55: #{tpu_custom_call.1} parent=47 // pred_region
          %365 = dma.done [#allocation6], 16
        $region56: #{tpu_custom_call.1} parent=47 // pred_fallthru
          _
        // Predicated region
        $region57: #{tpu_custom_call.1} parent=47 // pred_check
          %p366 = pneg %p116
        $region58: #{tpu_custom_call.1} parent=47 // pred_check_branch
          %368 = sbr.rel (%p366) target = $region60
        $region59: #{tpu_custom_call.1} parent=47 // pred_region
          %370 = dma.done [#allocation6], 512
        $region60: #{tpu_custom_call.1} parent=47 // pred_fallthru
          _
        // Predicated region
        $region61: #{tpu_custom_call.1} parent=47 // pred_check
          %p371 = pneg %p158
        $region62: #{tpu_custom_call.1} parent=47 // pred_check_branch
          %373 = sbr.rel (%p371) target = $region64
        $region63: #{tpu_custom_call.1} parent=47 // pred_region
          %375 = dma.done [#allocation9], 512
        $region64: #{tpu_custom_call.1} parent=47 // pred_fallthru
          _
        %s376 = sand.u32 %s40, 1
        %s377 = scalar_lea.sflag [#allocation3], %s376
        %s378 = sand.u32 %s40, 1
        %s379 = smul.addr %s378, 8
        %s380 = scalar_lea.vmem [#allocation2], %s379
        %p381 = pneg %p53
        %p382 = pneg %p50
        %p383 = pneg %p74
        %p384 = pneg %p71
        %p385 = pneg %p95
        %p386 = pneg %p92
        %p387 = pneg %p116
        %p388 = pneg %p113
        %p389 = pneg %p137
        %p390 = pneg %p134
        %p391 = pneg %p158
        %p392 = pneg %p155
        %p393 = pneg %p179
        %p394 = pneg %p176
        %p395 = pneg %p205
        %p396 = pneg %p202
        %s397 = sand.u32 %s192, 1
        %s398 = scalar_lea.sflag [#allocation4], %s397
        %s399 = sand.u32 %s192, 1
        %s400 = smul.addr %s399, 8
        %s401 = scalar_lea.vmem [#allocation10], %s400
        %p402 = pneg %p231
        %p403 = pneg %p228
        %s404 = sand.u32 %s32, 1
        %s405 = scalar_lea.sflag [#allocation12], %s404
        %s406 = sand.u32 %s218, 1
        %s407 = smul.addr %s406, 8
        %s408 = scalar_lea.vmem [#allocation11], %s407
        %p409 = pneg %p257
        %p410 = pneg %p254
        %s411 = sand.u32 %s32, 1
        %s412 = scalar_lea.sflag [#allocation12], %s411
        %s413 = sand.u32 %s244, 1
        %s414 = smul.addr %s413, 8
        %s415 = scalar_lea.vmem [#allocation13], %s414
        %v416 = vld [vmem:[%s355] sm:$0xff]
        %v417 = vld [vmem:[#allocation5] sm:$0x1]
        %v418 = vld [vmem:[%s2] sm:$0x1]
        %vm419 = vcmask 261120
        %v420 = vsel %vm419, %v416, 0.0
        %421 = vadd.xlane.f32.xlu0 %v420
        %v422 = vpop.xlane.xlu0 %421
        %v423 = vrcp.pop 32.0
        %v424 = vmul.f32 32.0, %v423
        %v425 = vsub.f32 1.0, %v424
        %v426 = vmul.f32 %v423, %v425
        %v427 = vadd.f32 %v423, %v426
        %vm428 = vweird.f32 %v423
        %v429 = vsel %vm428, %v423, %v427
        %v430 = vmul.f32 %v422, %v429
        %v431 = vsub.f32 %v416, %v430
        %v432 = vmul.f32 %v431, %v431
        %v433 = vsel %vm419, %v432, 0.0
        %434 = vadd.xlane.f32.xlu0 %v433
        %v435 = vpop.xlane.xlu0 %434
        %v436 = vmul.f32 %v435, %v429
        %v437 = vadd.f32 %v436, 1e-05
        %v438 = vrsqrt.pop %v437
        %v439 = vmul.f32 %v438, %v437
        %v440 = vmul.f32 %v439, %v438
        %v441 = vmul.f32 0.5, %v440
        %v442 = vsub.f32 1.5, %v441
        %v443 = vmul.f32 %v438, %v442
        %vm444 = vweird.f32 %v437
        %vm445 = vweird.f32 %v438
        %vm446 = vmor %vm444, %vm445
        %v447 = vsel %vm446, %v438, %v443
        %v448 = vmul.f32 %v431, %v447
        %v450 = vperm.slane %v417, 0
        %v452 = vmul.f32 %v448, %v450
        %v454 = vperm.slane %v418, 0
        %v456 = vadd.f32 %v452, %v454
        %v457 = vld [vmem:[#allocation7] sm:$0xff]
        %v458 = vld [vmem:[#allocation7 + $0x8] sm:$0xff]
        %v459 = vld [vmem:[#allocation7 + $0x10] sm:$0xff]
        %v460 = vld [vmem:[#allocation7 + $0x18] sm:$0xff]
        %v461 = vld [vmem:[%s4] sm:$0x1]
        %v463 = vperm.slane %v461, 0
        %v466 = vsel %vm419, %v456, 0
        %468 = vmatpush.msra.mxu0 0.0
        %469 = vmatpush.msra.mxu0 0.0
        %470 = vmatpush.msra.mxu0 0.0
        %471 = vmatpush.msra.mxu0 0.0
        %472 = vmatpush.msra.mxu0 0.0
        %473 = vmatpush.msra.mxu0 0.0
        %474 = vmatpush.msra.mxu0 0.0
        %475 = vmatpush.msra.mxu0 0.0
        %476 = vmatpush.msra.mxu0 0.0
        %477 = vmatpush.msra.mxu0 0.0
        %478 = vmatpush.msra.mxu0 0.0
        %479 = vmatpush.msra.mxu0 0.0
        %480 = vmatpush.msra.mxu0 %v460
        %481 = vmatpush.msra.mxu0 %v459
        %482 = vmatpush.msra.mxu0 %v458
        %483 = vmatpush.msra.mxu0 %v457
        %484 = vmatmul.f32.gmra.mxu0 %v466
        %v485 = vpop.f32.mrf.mxu0
        %v486 = vadd.f32 %v463, %v485
        %487 = vdwg.mxu0
        %v488 = vlaneseq
        %v489 = vshrl.u32 %v488, 7
        %v490 = vlaneseq
        %v491 = vand.u32 %v490, 127
        %vm492 = vcmp.ge.s32.totalorder %v489, %v491
        %v493 = vsel %vm492, 1, 0
        %v494 = vcvt.s32.f32 %v493
        %v495 = vld [vmem:[#allocation8] sm:$0xff]
        %v496 = vld [vmem:[#allocation8 + $0x8] sm:$0xff]
        %v497 = vld [vmem:[#allocation8 + $0x10] sm:$0xff]
        %v498 = vld [vmem:[#allocation8 + $0x18] sm:$0xff]
        %500 = vrot.lane.b32.xlu0 %v486, 96
        %v501 = vpop.permute.xlu0 %500
        %vm502 = vcmask 64512
        %v503 = vsel %vm502, %v486, 0
        %v505 = vsel %vm502, %v501, 0
        %507 = vmatpush.xpose.msra.mxu0 0.0
        %508 = vmatpush.xpose.msra.mxu0 0.0
        %509 = vmatpush.xpose.msra.mxu0 0.0
        %510 = vmatpush.xpose.msra.mxu0 0.0
        %511 = vmatpush.xpose.msra.mxu0 0.0
        %512 = vmatpush.xpose.msra.mxu0 0.0
        %513 = vmatpush.xpose.msra.mxu0 0.0
        %514 = vmatpush.xpose.msra.mxu0 0.0
        %515 = vmatpush.xpose.msra.mxu0 0.0
        %516 = vmatpush.xpose.msra.mxu0 0.0
        %517 = vmatpush.xpose.msra.mxu0 0.0
        %518 = vmatpush.xpose.msra.mxu0 0.0
        %519 = vmatpush.xpose.msra.mxu0 0.0
        %520 = vmatpush.xpose.msra.mxu0 0.0
        %521 = vmatpush.xpose.msra.mxu0 0.0
        %522 = vmatpush.xpose.msra.mxu0 %v505
        %523 = vmatmul.f32.gmra.mxu0 %v503
        %v524 = vpop.f32.mrf.mxu0
        %v525 = vadd.f32 0.0, %v524
        %526 = vdwg.mxu0
        %v527 = vmul.f32 %v525, %v494
        %v528 = vsub.f32 1.0, %v494
        %v529 = vmul.f32 %v528, 1e+10
        %v530 = vsub.f32 %v527, %v529
        %v531 = vsel %vm502, %v530, -inf
        %532 = vmax.xlane.f32.xlu0 %v531
        %v533 = vpop.xlane.xlu0 %532
        %v534 = vsub.f32 %v530, %v533
        %v535 = vmul.f32 %v534, 1.442695
        %v536 = vpow.pop %v535
        %v537 = vsel %vm502, %v536, 0.0
        %538 = vadd.xlane.f32.xlu0 %v537
        %v539 = vpop.xlane.xlu0 %538
        %v540 = vrcp.pop %v539
        %v541 = vmul.f32 %v539, %v540
        %v542 = vsub.f32 1.0, %v541
        %v543 = vmul.f32 %v540, %v542
        %v544 = vadd.f32 %v540, %v543
        %vm545 = vweird.f32 %v539
        %vm546 = vweird.f32 %v540
        %vm547 = vmor %vm545, %vm546
        %v548 = vsel %vm547, %v540, %v544
        %v549 = vand.u32 2147483647, %v539
        %vm550 = vcmp.eq.f32.partialorder %v549, 8.507059e+37
        %v551 = vand.u32 %v539, 2147483648
        %v552 = vor.u32 1.1754944e-38, %v551
        %v553 = vsel %vm550, %v552, %v548
        %v554 = vmul.f32 %v536, %v553
        %555 = vrot.lane.b32.xlu0 %v486, 64
        %v556 = vpop.permute.xlu0 %555
        %v559 = vsel %vm502, %v554, 0
        %561 = vmatpush.msra.mxu0 0.0
        %562 = vmatpush.msra.mxu0 0.0
        %563 = vmatpush.msra.mxu0 0.0
        %564 = vmatpush.msra.mxu0 0.0
        %565 = vmatpush.msra.mxu0 0.0
        %566 = vmatpush.msra.mxu0 0.0
        %567 = vmatpush.msra.mxu0 0.0
        %568 = vmatpush.msra.mxu0 0.0
        %569 = vmatpush.msra.mxu0 0.0
        %570 = vmatpush.msra.mxu0 0.0
        %571 = vmatpush.msra.mxu0 0.0
        %572 = vmatpush.msra.mxu0 0.0
        %573 = vmatpush.msra.mxu0 0.0
        %574 = vmatpush.msra.mxu0 0.0
        %575 = vmatpush.msra.mxu0 0.0
        %576 = vmatpush.msra.mxu0 %v556
        %577 = vmatmul.f32.gmra.mxu0 %v559
        %v578 = vpop.f32.mrf.mxu0
        %v579 = vadd.f32 0.0, %v578
        %580 = vdwg.mxu0
        %581 = vrot.lane.b32.xlu0 %v486, 120
        %v582 = vpop.permute.xlu0 %581
        %583 = vrot.lane.b32.xlu0 %v486, 88
        %v584 = vpop.permute.xlu0 %583
        %v585 = vsel %vm502, %v582, 0
        %v587 = vsel %vm502, %v584, 0
        %589 = vmatpush.xpose.msra.mxu0 0.0
        %590 = vmatpush.xpose.msra.mxu0 0.0
        %591 = vmatpush.xpose.msra.mxu0 0.0
        %592 = vmatpush.xpose.msra.mxu0 0.0
        %593 = vmatpush.xpose.msra.mxu0 0.0
        %594 = vmatpush.xpose.msra.mxu0 0.0
        %595 = vmatpush.xpose.msra.mxu0 0.0
        %596 = vmatpush.xpose.msra.mxu0 0.0
        %597 = vmatpush.xpose.msra.mxu0 0.0
        %598 = vmatpush.xpose.msra.mxu0 0.0
        %599 = vmatpush.xpose.msra.mxu0 0.0
        %600 = vmatpush.xpose.msra.mxu0 0.0
        %601 = vmatpush.xpose.msra.mxu0 0.0
        %602 = vmatpush.xpose.msra.mxu0 0.0
        %603 = vmatpush.xpose.msra.mxu0 0.0
        %604 = vmatpush.xpose.msra.mxu0 %v587
        %605 = vmatmul.f32.gmra.mxu0 %v585
        %v606 = vpop.f32.mrf.mxu0
        %v607 = vadd.f32 0.0, %v606
        %608 = vdwg.mxu0
        %v609 = vmul.f32 %v607, %v494
        %v610 = vsub.f32 %v609, %v529
        %v611 = vsel %vm502, %v610, -inf
        %612 = vmax.xlane.f32.xlu0 %v611
        %v613 = vpop.xlane.xlu0 %612
        %v614 = vsub.f32 %v610, %v613
        %v615 = vmul.f32 %v614, 1.442695
        %v616 = vpow.pop %v615
        %v617 = vsel %vm502, %v616, 0.0
        %618 = vadd.xlane.f32.xlu0 %v617
        %v619 = vpop.xlane.xlu0 %618
        %v620 = vrcp.pop %v619
        %v621 = vmul.f32 %v619, %v620
        %v622 = vsub.f32 1.0, %v621
        %v623 = vmul.f32 %v620, %v622
        %v624 = vadd.f32 %v620, %v623
        %vm625 = vweird.f32 %v619
        %vm626 = vweird.f32 %v620
        %vm627 = vmor %vm625, %vm626
        %v628 = vsel %vm627, %v620, %v624
        %v629 = vand.u32 2147483647, %v619
        %vm630 = vcmp.eq.f32.partialorder %v629, 8.507059e+37
        %v631 = vand.u32 %v619, 2147483648
        %v632 = vor.u32 1.1754944e-38, %v631
        %v633 = vsel %vm630, %v632, %v628
        %v634 = vmul.f32 %v616, %v633
        %635 = vrot.lane.b32.xlu0 %v486, 56
        %v636 = vpop.permute.xlu0 %635
        %v639 = vsel %vm502, %v634, 0
        %641 = vmatpush.msra.mxu0 0.0
        %642 = vmatpush.msra.mxu0 0.0
        %643 = vmatpush.msra.mxu0 0.0
        %644 = vmatpush.msra.mxu0 0.0
        %645 = vmatpush.msra.mxu0 0.0
        %646 = vmatpush.msra.mxu0 0.0
        %647 = vmatpush.msra.mxu0 0.0
        %648 = vmatpush.msra.mxu0 0.0
        %649 = vmatpush.msra.mxu0 0.0
        %650 = vmatpush.msra.mxu0 0.0
        %651 = vmatpush.msra.mxu0 0.0
        %652 = vmatpush.msra.mxu0 0.0
        %653 = vmatpush.msra.mxu0 0.0
        %654 = vmatpush.msra.mxu0 0.0
        %655 = vmatpush.msra.mxu0 0.0
        %656 = vmatpush.msra.mxu0 %v636
        %657 = vmatmul.f32.gmra.mxu0 %v639
        %v658 = vpop.f32.mrf.mxu0
        %v659 = vadd.f32 0.0, %v658
        %660 = vdwg.mxu0
        %v662 = vsel %vm502, %v659, 0
        %664 = vmatpush.msra.mxu0 0.0
        %665 = vmatpush.msra.mxu0 0.0
        %666 = vmatpush.msra.mxu0 0.0
        %667 = vmatpush.msra.mxu0 0.0
        %668 = vmatpush.msra.mxu0 0.0
        %669 = vmatpush.msra.mxu0 0.0
        %670 = vmatpush.msra.mxu0 0.0
        %671 = vmatpush.msra.mxu0 0.0
        %672 = vmatpush.msra.mxu0 0.0
        %673 = vmatpush.msra.mxu0 0.0
        %674 = vmatpush.msra.mxu0 0.0
        %675 = vmatpush.msra.mxu0 0.0
        %676 = vmatpush.msra.mxu0 0.0
        %677 = vmatpush.msra.mxu0 0.0
        %678 = vmatpush.msra.mxu0 0.0
        %679 = vmatpush.msra.mxu0 %v496
        %680 = vmatmul.f32.gmra.mxu0 %v662
        %v681 = vpop.f32.mrf.mxu0
        %v682 = vadd.f32 0.0, %v681
        %683 = vdwg.mxu0
        %v685 = vsel %vm502, %v579, 0
        %687 = vmatpush.msra.mxu0 0.0
        %688 = vmatpush.msra.mxu0 0.0
        %689 = vmatpush.msra.mxu0 0.0
        %690 = vmatpush.msra.mxu0 0.0
        %691 = vmatpush.msra.mxu0 0.0
        %692 = vmatpush.msra.mxu0 0.0
        %693 = vmatpush.msra.mxu0 0.0
        %694 = vmatpush.msra.mxu0 0.0
        %695 = vmatpush.msra.mxu0 0.0
        %696 = vmatpush.msra.mxu0 0.0
        %697 = vmatpush.msra.mxu0 0.0
        %698 = vmatpush.msra.mxu0 0.0
        %699 = vmatpush.msra.mxu0 0.0
        %700 = vmatpush.msra.mxu0 0.0
        %701 = vmatpush.msra.mxu0 0.0
        %702 = vmatpush.msra.mxu0 %v495
        %703 = vmatmul.f32.gmra.mxu0 %v685
        %v704 = vpop.f32.mrf.mxu0
        %v705 = vadd.f32 %v682, %v704
        %706 = vdwg.mxu0
        %707 = vrot.lane.b32.xlu0 %v486, 112
        %v708 = vpop.permute.xlu0 %707
        %709 = vrot.lane.b32.xlu0 %v486, 80
        %v710 = vpop.permute.xlu0 %709
        %v711 = vsel %vm502, %v708, 0
        %v713 = vsel %vm502, %v710, 0
        %715 = vmatpush.xpose.msra.mxu0 0.0
        %716 = vmatpush.xpose.msra.mxu0 0.0
        %717 = vmatpush.xpose.msra.mxu0 0.0
        %718 = vmatpush.xpose.msra.mxu0 0.0
        %719 = vmatpush.xpose.msra.mxu0 0.0
        %720 = vmatpush.xpose.msra.mxu0 0.0
        %721 = vmatpush.xpose.msra.mxu0 0.0
        %722 = vmatpush.xpose.msra.mxu0 0.0
        %723 = vmatpush.xpose.msra.mxu0 0.0
        %724 = vmatpush.xpose.msra.mxu0 0.0
        %725 = vmatpush.xpose.msra.mxu0 0.0
        %726 = vmatpush.xpose.msra.mxu0 0.0
        %727 = vmatpush.xpose.msra.mxu0 0.0
        %728 = vmatpush.xpose.msra.mxu0 0.0
        %729 = vmatpush.xpose.msra.mxu0 0.0
        %730 = vmatpush.xpose.msra.mxu0 %v713
        %731 = vmatmul.f32.gmra.mxu0 %v711
        %v732 = vpop.f32.mrf.mxu0
        %v733 = vadd.f32 0.0, %v732
        %734 = vdwg.mxu0
        %v735 = vmul.f32 %v733, %v494
        %v736 = vsub.f32 %v735, %v529
        %v737 = vsel %vm502, %v736, -inf
        %738 = vmax.xlane.f32.xlu0 %v737
        %v739 = vpop.xlane.xlu0 %738
        %v740 = vsub.f32 %v736, %v739
        %v741 = vmul.f32 %v740, 1.442695
        %v742 = vpow.pop %v741
        %v743 = vsel %vm502, %v742, 0.0
        %744 = vadd.xlane.f32.xlu0 %v743
        %v745 = vpop.xlane.xlu0 %744
        %v746 = vrcp.pop %v745
        %v747 = vmul.f32 %v745, %v746
        %v748 = vsub.f32 1.0, %v747
        %v749 = vmul.f32 %v746, %v748
        %v750 = vadd.f32 %v746, %v749
        %vm751 = vweird.f32 %v745
        %vm752 = vweird.f32 %v746
        %vm753 = vmor %vm751, %vm752
        %v754 = vsel %vm753, %v746, %v750
        %v755 = vand.u32 2147483647, %v745
        %vm756 = vcmp.eq.f32.partialorder %v755, 8.507059e+37
        %v757 = vand.u32 %v745, 2147483648
        %v758 = vor.u32 1.1754944e-38, %v757
        %v759 = vsel %vm756, %v758, %v754
        %v760 = vmul.f32 %v742, %v759
        %761 = vrot.lane.b32.xlu0 %v486, 48
        %v762 = vpop.permute.xlu0 %761
        %v765 = vsel %vm502, %v760, 0
        %767 = vmatpush.msra.mxu0 0.0
        %768 = vmatpush.msra.mxu0 0.0
        %769 = vmatpush.msra.mxu0 0.0
        %770 = vmatpush.msra.mxu0 0.0
        %771 = vmatpush.msra.mxu0 0.0
        %772 = vmatpush.msra.mxu0 0.0
        %773 = vmatpush.msra.mxu0 0.0
        %774 = vmatpush.msra.mxu0 0.0
        %775 = vmatpush.msra.mxu0 0.0
        %776 = vmatpush.msra.mxu0 0.0
        %777 = vmatpush.msra.mxu0 0.0
        %778 = vmatpush.msra.mxu0 0.0
        %779 = vmatpush.msra.mxu0 0.0
        %780 = vmatpush.msra.mxu0 0.0
        %781 = vmatpush.msra.mxu0 0.0
        %782 = vmatpush.msra.mxu0 %v762
        %783 = vmatmul.f32.gmra.mxu0 %v765
        %v784 = vpop.f32.mrf.mxu0
        %v785 = vadd.f32 0.0, %v784
        %786 = vdwg.mxu0
        %v788 = vsel %vm502, %v785, 0
        %790 = vmatpush.msra.mxu0 0.0
        %791 = vmatpush.msra.mxu0 0.0
        %792 = vmatpush.msra.mxu0 0.0
        %793 = vmatpush.msra.mxu0 0.0
        %794 = vmatpush.msra.mxu0 0.0
        %795 = vmatpush.msra.mxu0 0.0
        %796 = vmatpush.msra.mxu0 0.0
        %797 = vmatpush.msra.mxu0 0.0
        %798 = vmatpush.msra.mxu0 0.0
        %799 = vmatpush.msra.mxu0 0.0
        %800 = vmatpush.msra.mxu0 0.0
        %801 = vmatpush.msra.mxu0 0.0
        %802 = vmatpush.msra.mxu0 0.0
        %803 = vmatpush.msra.mxu0 0.0
        %804 = vmatpush.msra.mxu0 0.0
        %805 = vmatpush.msra.mxu0 %v497
        %806 = vmatmul.f32.gmra.mxu0 %v788
        %v807 = vpop.f32.mrf.mxu0
        %v808 = vadd.f32 0.0, %v807
        %809 = vdwg.mxu0
        %v810 = vadd.f32 %v705, %v808
        %811 = vrot.lane.b32.xlu0 %v486, 104
        %v812 = vpop.permute.xlu0 %811
        %813 = vrot.lane.b32.xlu0 %v486, 72
        %v814 = vpop.permute.xlu0 %813
        %v815 = vsel %vm502, %v812, 0
        %v817 = vsel %vm502, %v814, 0
        %819 = vmatpush.xpose.msra.mxu0 0.0
        %820 = vmatpush.xpose.msra.mxu0 0.0
        %821 = vmatpush.xpose.msra.mxu0 0.0
        %822 = vmatpush.xpose.msra.mxu0 0.0
        %823 = vmatpush.xpose.msra.mxu0 0.0
        %824 = vmatpush.xpose.msra.mxu0 0.0
        %825 = vmatpush.xpose.msra.mxu0 0.0
        %826 = vmatpush.xpose.msra.mxu0 0.0
        %827 = vmatpush.xpose.msra.mxu0 0.0
        %828 = vmatpush.xpose.msra.mxu0 0.0
        %829 = vmatpush.xpose.msra.mxu0 0.0
        %830 = vmatpush.xpose.msra.mxu0 0.0
        %831 = vmatpush.xpose.msra.mxu0 0.0
        %832 = vmatpush.xpose.msra.mxu0 0.0
        %833 = vmatpush.xpose.msra.mxu0 0.0
        %834 = vmatpush.xpose.msra.mxu0 %v817
        %835 = vmatmul.f32.gmra.mxu0 %v815
        %v836 = vpop.f32.mrf.mxu0
        %v837 = vadd.f32 0.0, %v836
        %838 = vdwg.mxu0
        %v839 = vmul.f32 %v837, %v494
        %v840 = vsub.f32 %v839, %v529
        %v841 = vsel %vm502, %v840, -inf
        %842 = vmax.xlane.f32.xlu0 %v841
        %v843 = vpop.xlane.xlu0 %842
        %v844 = vsub.f32 %v840, %v843
        %v845 = vmul.f32 %v844, 1.442695
        %v846 = vpow.pop %v845
        %v847 = vsel %vm502, %v846, 0.0
        %848 = vadd.xlane.f32.xlu0 %v847
        %v849 = vpop.xlane.xlu0 %848
        %v850 = vrcp.pop %v849
        %v851 = vmul.f32 %v849, %v850
        %v852 = vsub.f32 1.0, %v851
        %v853 = vmul.f32 %v850, %v852
        %v854 = vadd.f32 %v850, %v853
        %vm855 = vweird.f32 %v849
        %vm856 = vweird.f32 %v850
        %vm857 = vmor %vm855, %vm856
        %v858 = vsel %vm857, %v850, %v854
        %v859 = vand.u32 2147483647, %v849
        %vm860 = vcmp.eq.f32.partialorder %v859, 8.507059e+37
        %v861 = vand.u32 %v849, 2147483648
        %v862 = vor.u32 1.1754944e-38, %v861
        %v863 = vsel %vm860, %v862, %v858
        %v864 = vmul.f32 %v846, %v863
        %865 = vrot.lane.b32.xlu0 %v486, 40
        %v866 = vpop.permute.xlu0 %865
        %v869 = vsel %vm502, %v864, 0
        %871 = vmatpush.msra.mxu0 0.0
        %872 = vmatpush.msra.mxu0 0.0
        %873 = vmatpush.msra.mxu0 0.0
        %874 = vmatpush.msra.mxu0 0.0
        %875 = vmatpush.msra.mxu0 0.0
        %876 = vmatpush.msra.mxu0 0.0
        %877 = vmatpush.msra.mxu0 0.0
        %878 = vmatpush.msra.mxu0 0.0
        %879 = vmatpush.msra.mxu0 0.0
        %880 = vmatpush.msra.mxu0 0.0
        %881 = vmatpush.msra.mxu0 0.0
        %882 = vmatpush.msra.mxu0 0.0
        %883 = vmatpush.msra.mxu0 0.0
        %884 = vmatpush.msra.mxu0 0.0
        %885 = vmatpush.msra.mxu0 0.0
        %886 = vmatpush.msra.mxu0 %v866
        %887 = vmatmul.f32.gmra.mxu0 %v869
        %v888 = vpop.f32.mrf.mxu0
        %v889 = vadd.f32 0.0, %v888
        %890 = vdwg.mxu0
        %v892 = vsel %vm502, %v889, 0
        %894 = vmatpush.msra.mxu0 0.0
        %895 = vmatpush.msra.mxu0 0.0
        %896 = vmatpush.msra.mxu0 0.0
        %897 = vmatpush.msra.mxu0 0.0
        %898 = vmatpush.msra.mxu0 0.0
        %899 = vmatpush.msra.mxu0 0.0
        %900 = vmatpush.msra.mxu0 0.0
        %901 = vmatpush.msra.mxu0 0.0
        %902 = vmatpush.msra.mxu0 0.0
        %903 = vmatpush.msra.mxu0 0.0
        %904 = vmatpush.msra.mxu0 0.0
        %905 = vmatpush.msra.mxu0 0.0
        %906 = vmatpush.msra.mxu0 0.0
        %907 = vmatpush.msra.mxu0 0.0
        %908 = vmatpush.msra.mxu0 0.0
        %909 = vmatpush.msra.mxu0 %v498
        %910 = vmatmul.f32.gmra.mxu0 %v892
        %v911 = vpop.f32.mrf.mxu0
        %v912 = vadd.f32 0.0, %v911
        %913 = vdwg.mxu0
        %v914 = vadd.f32 %v810, %v912
        %v915 = vld [vmem:[%s6] sm:$0x1]
        %v917 = vperm.slane %v915, 0
        %v919 = vadd.f32 %v914, %v917
        %v920 = vadd.f32 %v416, %v919
        %921 = vst.msk [vmem:[%s401] sm:$0xff] %vm419, %v920
        %923 = vst.msk [vmem:[%s408] sm:$0xff] %vm419, %v501
        %924 = vst.msk [vmem:[%s415] sm:$0xff] %vm419, %v556
        %s925 = sand.u32 %s192, 1
        %s926 = scalar_lea.sflag [#allocation4], %s925
        %s927 = sand.u32 %s192, 1
        %s928 = smul.addr %s927, 8
        %s929 = scalar_lea.vmem [#allocation10], %s928
        %s930 = sand.u32 %s32, 1
        %s931 = scalar_lea.sflag [#allocation12], %s930
        %s932 = sand.u32 %s218, 1
        %s933 = smul.addr %s932, 8
        %s934 = scalar_lea.vmem [#allocation11], %s933
        %s935 = sand.u32 %s32, 1
        %s936 = scalar_lea.sflag [#allocation12], %s935
        %s937 = sand.u32 %s244, 1
        %s938 = smul.addr %s937, 8
        %s939 = scalar_lea.vmem [#allocation13], %s938
        // Predicated region
        $region65: #{tpu_custom_call.1} parent=47 // pred_check
          %p940 = pneg %p202
        $region66: #{tpu_custom_call.1} parent=47 // pred_check_branch
          %942 = sbr.rel (%p940) target = $region68
        $region67: #{tpu_custom_call.1} parent=47 // pred_region
          %944 = vsyncadd %s926, 0
          %s945 = smul.addr %s32, 8
          %s946 = scalar_lea.hbm %s7, %s945
          %s948 = sshll.u32 %s929, 4
          %s949 = int_to_ptr.vmem [resolvable:$true] %s948
          %s950 = sshll.u32 %s946, 4
          %s951 = int_to_ptr.hbm [resolvable:$true] %s950
          %953 = dma.vmem_to_hbm [thread:$0]  %s949, 128, %s951, %s926
        $region68: #{tpu_custom_call.1} parent=47 // pred_fallthru
          _
        // Predicated region
        $region69: #{tpu_custom_call.1} parent=47 // pred_check
          %p954 = pneg %p228
        $region70: #{tpu_custom_call.1} parent=47 // pred_check_branch
          %956 = sbr.rel (%p954) target = $region72
        $region71: #{tpu_custom_call.1} parent=47 // pred_region
          %958 = vsyncadd %s931, 0
          %s959 = smul.addr %s32, 8
          %s960 = scalar_lea.hbm %s8, %s959
          %s962 = sshll.u32 %s934, 4
          %s963 = int_to_ptr.vmem [resolvable:$true] %s962
          %s964 = sshll.u32 %s960, 4
          %s965 = int_to_ptr.hbm [resolvable:$true] %s964
          %967 = dma.vmem_to_hbm [thread:$0]  %s963, 128, %s965, %s931
        $region72: #{tpu_custom_call.1} parent=47 // pred_fallthru
          _
        // Predicated region
        $region73: #{tpu_custom_call.1} parent=47 // pred_check
          %p968 = pneg %p254
        $region74: #{tpu_custom_call.1} parent=47 // pred_check_branch
          %970 = sbr.rel (%p968) target = $region76
        $region75: #{tpu_custom_call.1} parent=47 // pred_region
          %972 = vsyncadd %s936, 0
          %s973 = smul.addr %s32, 8
          %s974 = scalar_lea.hbm %s9, %s973
          %s976 = sshll.u32 %s939, 4
          %s977 = int_to_ptr.vmem [resolvable:$true] %s976
          %s978 = sshll.u32 %s974, 4
          %s979 = int_to_ptr.hbm [resolvable:$true] %s978
          %981 = dma.vmem_to_hbm [thread:$0]  %s977, 128, %s979, %s936
        $region76: #{tpu_custom_call.1} parent=47 // pred_fallthru
          _
      $region48: #{tpu_custom_call.1} parent=5 // pred_fallthru
        _
      %p982 = scmp.le.s32.totalorder 2, %s27
      // Predicated region
      $region77: #{tpu_custom_call.1} parent=5 // pred_check
        %p983 = pneg %p982
      $region78: #{tpu_custom_call.1} parent=5 // pred_check_branch
        %985 = sbr.rel (%p983) target = $region80
      $region79: #{tpu_custom_call.1} parent=5 // pred_region
        %s986 = ssub.s32 %s27, 2
        // Predicated region
        $region81: #{tpu_custom_call.1} parent=79 // pred_check
          %p987 = pneg %p208
        $region82: #{tpu_custom_call.1} parent=79 // pred_check_branch
          %989 = sbr.rel (%p987) target = $region84
        $region83: #{tpu_custom_call.1} parent=79 // pred_region
          %s990 = sand.u32 %s193, 1
          %s991 = scalar_lea.sflag [#allocation4], %s990
          %s992 = sand.u32 %s193, 1
          %s993 = smul.addr %s992, 8
          %s994 = scalar_lea.vmem [#allocation10], %s993
          %996 = dma.done %s991, 128
        $region84: #{tpu_custom_call.1} parent=79 // pred_fallthru
          _
        // Predicated region
        $region85: #{tpu_custom_call.1} parent=79 // pred_check
          %p997 = pneg %p234
        $region86: #{tpu_custom_call.1} parent=79 // pred_check_branch
          %999 = sbr.rel (%p997) target = $region88
        $region87: #{tpu_custom_call.1} parent=79 // pred_region
          %s1000 = sand.u32 %s33, 1
          %s1001 = scalar_lea.sflag [#allocation12], %s1000
          %s1002 = sand.u32 %s219, 1
          %s1003 = smul.addr %s1002, 8
          %s1004 = scalar_lea.vmem [#allocation11], %s1003
          %1006 = dma.done %s1001, 128
        $region88: #{tpu_custom_call.1} parent=79 // pred_fallthru
          _
        // Predicated region
        $region89: #{tpu_custom_call.1} parent=79 // pred_check
          %p1007 = pneg %p260
        $region90: #{tpu_custom_call.1} parent=79 // pred_check_branch
          %1009 = sbr.rel (%p1007) target = $region92
        $region91: #{tpu_custom_call.1} parent=79 // pred_region
          %s1010 = sand.u32 %s33, 1
          %s1011 = scalar_lea.sflag [#allocation12], %s1010
          %s1012 = sand.u32 %s245, 1
          %s1013 = smul.addr %s1012, 8
          %s1014 = scalar_lea.vmem [#allocation13], %s1013
          %1016 = dma.done %s1011, 128
        $region92: #{tpu_custom_call.1} parent=79 // pred_fallthru
          _
      $region80: #{tpu_custom_call.1} parent=5 // pred_fallthru
        _
    $region6: #{tpu_custom_call.1} parent=1 // loop_footer
      %s31 = sadd.s32 1, %s27
    $region7: #{tpu_custom_call.1} parent=1 // loop_footer_branch
      %26 = sbr.rel target = $region3
    $region8: #{tpu_custom_call.1} parent=1 // loop_exit
      _
    %1017 = vsyncpa [#allocation3], 1
    %s1018 = scalar_lea.sflag [#allocation3], 1
    %1019 = vsyncpa %s1018, 1
    %1020 = vsyncpa [#allocation6], 1
    %1021 = vsyncpa [#allocation9], 1
    %1022 = vsyncpa [#allocation4], 1
    %s1023 = scalar_lea.sflag [#allocation4], 1
    %1024 = vsyncpa %s1023, 1
    %1025 = vsyncpa [#allocation12], 1
    %s1026 = scalar_lea.sflag [#allocation12], 1
    %1027 = vsyncpa %s1026, 1

</llo_original>
